<compile_context>
chip_gen: v7x
topology: tpu7x:2x2x1
jax: 0.10.0
libtpu: 0.0.40
codegen_flags: <defaults>
</compile_context>

<pallas_src>
import functools

import jax
import jax.numpy as jnp
from jax import lax
from jax.experimental import pallas as pl
from jax.experimental.pallas import tpu as pltpu

BN_EPS = 1e-5
_LANE = 128


def _elu(x):
    # ELU(alpha=1): x if x > 0 else exp(x) - 1  (clamp exp arg for safety)
    return jnp.where(x > 0, x, jnp.exp(jnp.minimum(x, 0.0)) - 1.0)


def _round_up(x, m):
    return (x + m - 1) // m * m


def _vmem_limit(estimate_bytes):
    # >= 32 MiB (beats v5e's 16 MiB scoped default), <= 56 MiB (leaves
    # compiler-scratch headroom under v7x's 64 MiB physical VMEM).
    return int(min(56 * 1024 * 1024, max(32 * 1024 * 1024, 3 * estimate_bytes)))


# ----------------------------------------------------------------------------
# Pass 1: parent ConvTranspose3d(k=3,s=1,p=1) as one GEMM per R-block.
# The haloed input window is assembled in VMEM from three blocked views of the
# flattened padded input; the 27 taps become 27 shifted copies into a VMEM
# patch scratch, contracted in a single MXU GEMM.  Also emits per-block BN
# partials (sum, sum of squares) of the interior-masked activations.
# ----------------------------------------------------------------------------
def _parent_kernel(wT_ref, prev_ref, cur_ref, nxt_ref, mask_ref,
                   y_ref, psum_ref, psqs_ref, win_ref, patch_ref,
                   *, shifts, halo, rblk, cin, k_true):
    # Contiguous haloed window: global columns [i*RBLK - HALO, (i+1)*RBLK + HALO)
    win_ref[:, 0:halo] = prev_ref[...]
    win_ref[:, halo:halo + rblk] = cur_ref[...]
    win_ref[:, halo + rblk:halo + 2 * halo + rblk] = nxt_ref[...]

    # In-VMEM im2col: tap t lives at patch rows [t*Cin, (t+1)*Cin).
    for t, s in enumerate(shifts):
        patch_ref[t * cin:(t + 1) * cin, :] = win_ref[:, halo + s:halo + s + rblk]
    kp = patch_ref.shape[0]
    if kp > k_true:  # keep zero-padded contraction rows exactly zero
        patch_ref[k_true:kp, :] = jnp.zeros((kp - k_true, rblk), patch_ref.dtype)

    y = jnp.dot(wT_ref[...], patch_ref[...], preferred_element_type=jnp.float32)
    ym = y * mask_ref[...]                       # zero ring / right-pad columns
    y_ref[...] = ym.astype(y_ref.dtype)
    psum_ref[0] = jnp.sum(ym, axis=1, keepdims=True)
    psqs_ref[0] = jnp.sum(ym * ym, axis=1, keepdims=True)


# ----------------------------------------------------------------------------
# Pass 2: recompute vector = ELU(BN(y)) per block; emit per-block Gram stats
# (sum(v), v v^T) so the 8-child BN statistics reduce to tiny wrapper matmuls.
# ----------------------------------------------------------------------------
def _child_stats_kernel(y_ref, ps_ref, pb_ref, g_ref, sv_ref):
    v = _elu(y_ref[...].astype(jnp.float32) * ps_ref[...] + pb_ref[...])
    g_ref[0] = lax.dot_general(v, v, (((1,), (1,)), ((), ())),
                               preferred_element_type=jnp.float32)
    sv_ref[0] = jnp.sum(v, axis=1, keepdims=True)


# ----------------------------------------------------------------------------
# Pass 3: recompute vector, fused 8-child 1x1x1 conv GEMM, child BN + ELU.
# ----------------------------------------------------------------------------
def _child_out_kernel(y_ref, ps_ref, pb_ref, wc_ref, cs_ref, cb_ref, out_ref):
    v = _elu(y_ref[...].astype(jnp.float32) * ps_ref[...] + pb_ref[...])
    z = jnp.dot(wc_ref[...], v.astype(wc_ref.dtype),
                preferred_element_type=jnp.float32)
    out_ref[...] = _elu(z * cs_ref[...] + cb_ref[...])


# ----------------------------------------------------------------------------
# Parameter preparation (hoisted out of the hot path; call once per param set).
# ----------------------------------------------------------------------------
def prepare_node_decoder_params(params, matmul_dtype=jnp.bfloat16):
    w_mlp = params["w_mlp"]                               # (Cin, Cm, 3, 3, 3)
    cin, cm = int(w_mlp.shape[0]), int(w_mlp.shape[1])
    k = 27 * cin
    kp = _round_up(k, _LANE)
    # ConvTranspose3d(k=3,s=1,p=1) == correlation with the flipped kernel and
    # swapped channel axes; fold the 27 taps into one (Cm, 27*Cin) matrix whose
    # column order matches the patch scratch layout (tap-major, channel-minor).
    w_flip = jnp.flip(w_mlp, axis=(2, 3, 4))
    wT = jnp.transpose(w_flip, (1, 2, 3, 4, 0)).reshape(cm, k)
    wT = jnp.pad(wT, ((0, 0), (0, kp - k))).astype(matmul_dtype)

    w_child = params["w_child"]                           # (8, Cm, Cout)
    nchild, _, cout = (int(s) for s in w_child.shape)
    ctot = nchild * cout
    ctot_p = _round_up(ctot, 8)
    wc = jnp.transpose(w_child, (0, 2, 1)).reshape(ctot, cm)
    wc_pad = jnp.pad(wc, ((0, ctot_p - ctot), (0, 0))).astype(matmul_dtype)

    return dict(
        wT=wT,                                            # (Cm, Kp)   mm dtype
        wc=wc_pad,                                        # (Ctot_p, Cm) mm dtype
        wc_f32=wc.astype(jnp.float32),                    # (Ctot, Cm) for stats
        bn_gamma=params["bn_gamma"].astype(jnp.float32),
        bn_beta=params["bn_beta"].astype(jnp.float32),
        child_gamma=params["child_gamma"].astype(jnp.float32),
        child_beta=params["child_beta"].astype(jnp.float32),
    )


def node_decoder_forward(parent_ncdhw, prepared):
    N, Cin, D, H, W = (int(s) for s in parent_ncdhw.shape)
    mm_dtype = prepared["wT"].dtype
    Cm, Kp = (int(s) for s in prepared["wT"].shape)
    K = 27 * Cin
    nchild, Cout = (int(s) for s in prepared["child_gamma"].shape)
    Ctot = nchild * Cout
    Ctot_p = int(prepared["wc"].shape[0])

    Dq, Hq, Wq = D + 2, H + 2, W + 2
    R = N * D * H * W                        # true per-channel element count
    Rq = N * Dq * Hq * Wq                    # padded-volume flattening length
    S = Hq * Wq + Wq + 1                     # max |tap shift| in flat coords
    HALO = _round_up(S, _LANE)
    ds = jnp.dtype(mm_dtype).itemsize

    # ---- R-block: lane-dense, multiple of HALO, >=2 blocks when possible
    #      (v7x megacore), bounded by a conservative double-buffered VMEM budget.
    def est_pass1(rblk):
        return (ds * (2 * Cm * Kp + 4 * Cin * HALO + 2 * Cin * rblk
                      + 2 * Cm * rblk + Cin * (rblk + 2 * HALO) + Kp * rblk)
                + 8 * rblk + (1 << 16))

    r_up = _round_up(Rq, HALO)
    RBLK = max(HALO, min(_round_up(2048, HALO), r_up))
    if r_up // RBLK < 2 <= r_up // HALO:
        RBLK = _round_up(-(-r_up // 2), HALO)            # split so nblk >= 2
    while RBLK > HALO and est_pass1(RBLK) > 40 * 1024 * 1024:
        RBLK = _round_up(RBLK // 2, HALO)
    Rpad = _round_up(Rq, RBLK)
    nblk = Rpad // RBLK
    ratio = RBLK // HALO
    nb_h = Rpad // HALO

    # ---- input: one-ring zero pad, channel-major flatten, right-pad to Rpad
    xp = jnp.pad(parent_ncdhw, ((0, 0), (0, 0), (1, 1), (1, 1), (1, 1)))
    x_flat = jnp.transpose(xp, (1, 0, 2, 3, 4)).reshape(Cin, Rq)
    x_flat = jnp.pad(x_flat, ((0, 0), (0, Rpad - Rq))).astype(mm_dtype)

    # interior mask (1 inside the original D*H*W box, 0 on the ring / padding);
    # zeroing y there keeps the parent stats exact and makes the pass-2
    # padded-column correction a closed-form constant.
    m3 = jnp.zeros((N, Dq, Hq, Wq), jnp.float32)
    m3 = m3.at[:, 1:D + 1, 1:H + 1, 1:W + 1].set(1.0)
    mask = jnp.pad(m3.reshape(1, Rq), ((0, 0), (0, Rpad - Rq)))

    shifts = tuple((kd - 1) * Hq * Wq + (kh - 1) * Wq + (kw - 1)
                   for kd in range(3) for kh in range(3) for kw in range(3))

    parent_kernel = functools.partial(
        _parent_kernel, shifts=shifts, halo=HALO, rblk=RBLK, cin=Cin, k_true=K)

    # --- Pass 1: haloed conv GEMM + parent BN partials -----------------------
    y, psum_b, psqs_b = pl.pallas_call(
        parent_kernel,
        out_shape=(jax.ShapeDtypeStruct((Cm, Rpad), mm_dtype),
                   jax.ShapeDtypeStruct((nblk, Cm, 1), jnp.float32),
                   jax.ShapeDtypeStruct((nblk, Cm, 1), jnp.float32)),
        grid=(nblk,),
        in_specs=[
            pl.BlockSpec((Cm, Kp), lambda i: (0, 0)),
            pl.BlockSpec((Cin, HALO),
                         lambda i: (0, jnp.maximum(i * ratio - 1, 0))),
            pl.BlockSpec((Cin, RBLK), lambda i: (0, i)),
            pl.BlockSpec((Cin, HALO),
                         lambda i: (0, jnp.minimum((i + 1) * ratio, nb_h - 1))),
            pl.BlockSpec((1, RBLK), lambda i: (0, i)),
        ],
        out_specs=(
            pl.BlockSpec((Cm, RBLK), lambda i: (0, i)),
            pl.BlockSpec((1, Cm, 1), lambda i: (i, 0, 0)),
            pl.BlockSpec((1, Cm, 1), lambda i: (i, 0, 0)),
        ),
        scratch_shapes=[
            pltpu.VMEM((Cin, RBLK + 2 * HALO), mm_dtype),    # haloed window
            pltpu.VMEM((Kp, RBLK), mm_dtype),                # patch matrix
        ],
        compiler_params=pltpu.CompilerParams(
            dimension_semantics=("parallel",),
            vmem_limit_bytes=_vmem_limit(est_pass1(RBLK))),
    )(prepared["wT"], x_flat, x_flat, x_flat, mask)

    # ---- fold parent BN into per-channel scale/shift (tiny wrapper math)
    pmean = jnp.sum(psum_b, axis=0)[:, 0] / R
    pvar = jnp.maximum(jnp.sum(psqs_b, axis=0)[:, 0] / R - pmean * pmean, 0.0)
    pinv = lax.rsqrt(pvar + BN_EPS)
    pscale = prepared["bn_gamma"] * pinv
    pshift = prepared["bn_beta"] - pmean * pscale
    ps_col = pscale.reshape(Cm, 1)
    pb_col = pshift.reshape(Cm, 1)

    # --- Pass 2: per-block Gram statistics of vector (K = RBLK contraction) --
    est2 = ds * 2 * Cm * RBLK + 4 * (Cm * RBLK + 8 * Cm * (Cm + 2)) + (1 << 16)
    gmat_b, svec_b = pl.pallas_call(
        _child_stats_kernel,
        out_shape=(jax.ShapeDtypeStruct((nblk, Cm, Cm), jnp.float32),
                   jax.ShapeDtypeStruct((nblk, Cm, 1), jnp.float32)),
        grid=(nblk,),
        in_specs=[
            pl.BlockSpec((Cm, RBLK), lambda i: (0, i)),
            pl.BlockSpec((Cm, 1), lambda i: (0, 0)),
            pl.BlockSpec((Cm, 1), lambda i: (0, 0)),
        ],
        out_specs=(
            pl.BlockSpec((1, Cm, Cm), lambda i: (i, 0, 0)),
            pl.BlockSpec((1, Cm, 1), lambda i: (i, 0, 0)),
        ),
        compiler_params=pltpu.CompilerParams(
            dimension_semantics=("parallel",),
            vmem_limit_bytes=_vmem_limit(int(est2))),
    )(y, ps_col, pb_col)

    # ---- child BN statistics from the Gram matrix.  Columns where y == 0
    # (ring + right padding, Rpad - R of them) contribute the constant vector
    # elu(pshift); subtract that contribution exactly, then push through wc.
    e = jnp.where(pshift > 0, pshift, jnp.exp(jnp.minimum(pshift, 0.0)) - 1.0)
    n_bad = float(Rpad - R)
    G = jnp.sum(gmat_b, axis=0) - n_bad * jnp.outer(e, e)
    sv = jnp.sum(svec_b, axis=0)[:, 0] - n_bad * e
    wc_f32 = prepared["wc_f32"]                              # (Ctot, Cm)
    zsum = wc_f32 @ sv                                       # (Ctot,)
    zss = jnp.sum((wc_f32 @ G) * wc_f32, axis=1)             # (Ctot,)
    cmean = zsum / R
    cvar = jnp.maximum(zss / R - cmean * cmean, 0.0)
    cinv = lax.rsqrt(cvar + BN_EPS)
    cgamma = prepared["child_gamma"].reshape(Ctot)
    cbeta = prepared["child_beta"].reshape(Ctot)
    cscale = jnp.pad(cgamma * cinv, (0, Ctot_p - Ctot)).reshape(Ctot_p, 1)
    cshift = jnp.pad(cbeta - cmean * cgamma * cinv,
                     (0, Ctot_p - Ctot)).reshape(Ctot_p, 1)

    # --- Pass 3: fused child GEMM + BN + ELU (lane-dense (8*Cout, R) output) --
    est3 = (ds * (2 * Cm * RBLK + 2 * Ctot_p * Cm)
            + 4 * (2 * Ctot_p * RBLK + 8 * Ctot_p) + (1 << 16))
    out = pl.pallas_call(
        _child_out_kernel,
        out_shape=jax.ShapeDtypeStruct((Ctot_p, Rpad), jnp.float32),
        grid=(nblk,),
        in_specs=[
            pl.BlockSpec((Cm, RBLK), lambda i: (0, i)),
            pl.BlockSpec((Cm, 1), lambda i: (0, 0)),
            pl.BlockSpec((Cm, 1), lambda i: (0, 0)),
            pl.BlockSpec((Ctot_p, Cm), lambda i: (0, 0)),
            pl.BlockSpec((Ctot_p, 1), lambda i: (0, 0)),
            pl.BlockSpec((Ctot_p, 1), lambda i: (0, 0)),
        ],
        out_specs=pl.BlockSpec((Ctot_p, RBLK), lambda i: (0, i)),
        compiler_params=pltpu.CompilerParams(
            dimension_semantics=("parallel",),
            vmem_limit_bytes=_vmem_limit(int(est3))),
    )(y, ps_col, pb_col, prepared["wc"], cscale, cshift)

    # ---- back to the module's NCDHW interface.
    # TODO(synk): let fused consumers take the lane-dense (8*Cout, R) layout to
    # skip this final XLA crop + transpose of the largest array.
    out = out[:Ctot, :Rq].reshape(nchild, Cout, N, Dq, Hq, Wq)
    out = out[:, :, :, 1:D + 1, 1:H + 1, 1:W + 1]
    out = jnp.transpose(out, (0, 2, 1, 3, 4, 5))             # (8, N, Cout, D, H, W)
    return [out[i] for i in range(nchild)]


def init_params(key, node_channels, node_channels_internal):
    """Deterministic xavier-uniform-style init (gain = sqrt(2), like the module)."""
    cin, cm = node_channels, node_channels_internal
    k1, k2 = jax.random.split(key)
    gain = 2.0 ** 0.5
    bound_mlp = gain * (6.0 / ((cin + cm) * 27)) ** 0.5
    w_mlp = jax.random.uniform(k1, (cin, cm, 3, 3, 3), jnp.float32,
                               -bound_mlp, bound_mlp)
    bound_child = gain * (6.0 / (cm + cin)) ** 0.5
    w_child = jax.random.uniform(k2, (8, cm, cin), jnp.float32,
                                 -bound_child, bound_child)
    return dict(
        w_mlp=w_mlp,
        w_child=w_child,
        bn_gamma=jnp.ones((cm,), jnp.float32),
        bn_beta=jnp.zeros((cm,), jnp.float32),
        child_gamma=jnp.ones((8, cin), jnp.float32),
        child_beta=jnp.zeros((8, cin), jnp.float32),
    )


def _reference_forward(parent, params):
    """Pure-jnp reference (same math as the PyTorch module) for validation."""
    N, Cin, D, H, W = parent.shape
    Cm = params["w_mlp"].shape[1]
    xp = jnp.pad(parent, ((0, 0), (0, 0), (1, 1), (1, 1), (1, 1)))
    w_flip = jnp.flip(params["w_mlp"], axis=(2, 3, 4))
    acc = jnp.zeros((N, Cm, D, H, W), jnp.float32)
    for kd in range(3):
        for kh in range(3):
            for kw in range(3):
                win = xp[:, :, kd:kd + D, kh:kh + H, kw:kw + W]
                acc = acc + jnp.einsum('ncdhw,cm->nmdhw', win,
                                       w_flip[:, :, kd, kh, kw])

    def bn_elu(x, gamma, beta):
        mean = jnp.mean(x, axis=(0, 2, 3, 4), keepdims=True)
        var = jnp.mean((x - mean) ** 2, axis=(0, 2, 3, 4), keepdims=True)
        y = (x - mean) * lax.rsqrt(var + BN_EPS)
        y = y * gamma.reshape(1, -1, 1, 1, 1) + beta.reshape(1, -1, 1, 1, 1)
        return jnp.where(y > 0, y, jnp.exp(jnp.minimum(y, 0.0)) - 1.0)

    vec = bn_elu(acc, params["bn_gamma"], params["bn_beta"])
    outs = []
    for i in range(8):
        z = jnp.einsum('nmdhw,mc->ncdhw', vec, params["w_child"][i])
        outs.append(bn_elu(z, params["child_gamma"][i], params["child_beta"][i]))
    return outs


if __name__ == "__main__":
    node_channels = 4
    node_channels_internal = 8
    N, D, H, W = 2, 4, 4, 4

    key = jax.random.PRNGKey(0)
    kx, kp = jax.random.split(key)
    parent = jax.random.normal(kx, (N, node_channels, D, H, W), jnp.float32)
    params = init_params(kp, node_channels, node_channels_internal)

    refs = _reference_forward(parent, params)

    # f32 operand path: tight check against the pure-jnp reference.
    prep32 = prepare_node_decoder_params(params, matmul_dtype=jnp.float32)
    fwd32 = jax.jit(functools.partial(node_decoder_forward, prepared=prep32))
    outs32 = jax.block_until_ready(fwd32(parent))
    assert len(outs32) == 8
    assert all(o.shape == (N, node_channels, D, H, W) for o in outs32)
    assert all(bool(jnp.isfinite(o).all()) for o in outs32)
    for o, r in zip(outs32, refs):
        assert bool(jnp.allclose(o, r, atol=2e-3, rtol=2e-3)), \
            float(jnp.max(jnp.abs(o - r)))

    # bf16 operand path (default): halves HBM traffic of the hot arrays,
    # f32 accumulation; validated at bf16-appropriate tolerance.
    prep16 = prepare_node_decoder_params(params)          # bfloat16 default
    fwd16 = jax.jit(functools.partial(node_decoder_forward, prepared=prep16))
    outs16 = jax.block_until_ready(fwd16(parent))
    assert all(o.shape == (N, node_channels, D, H, W) for o in outs16)
    assert all(bool(jnp.isfinite(o).all()) for o in outs16)
    for o, r in zip(outs16, refs):
        assert bool(jnp.allclose(o, r, atol=1e-1, rtol=1e-1)), \
            float(jnp.max(jnp.abs(o - r)))

    print("KERNEL_OK")
</pallas_src>

<mosaic_0001>
module attributes {stable_mosaic.version = 11 : i64} {
  func.func @_parent_kernel(%arg0: i32, %arg1: memref<8x128xf32, #tpu.memory_space<vmem>>, %arg2: memref<4x128xf32, #tpu.memory_space<vmem>>, %arg3: memref<4x256xf32, #tpu.memory_space<vmem>>, %arg4: memref<4x128xf32, #tpu.memory_space<vmem>>, %arg5: memref<1x256xf32, #tpu.memory_space<vmem>>, %arg6: memref<8x256xf32, #tpu.memory_space<vmem>>, %arg7: memref<1x8x1xf32, #tpu.memory_space<vmem>>, %arg8: memref<1x8x1xf32, #tpu.memory_space<vmem>>, %arg9: memref<4x512xf32, #tpu.memory_space<vmem>>, %arg10: memref<128x256xf32, #tpu.memory_space<vmem>>) attributes {dimension_semantics = [#tpu.dimension_semantics<parallel>], iteration_bounds = array<i64: 2>, scalar_prefetch = 0 : i64, scratch_operands = 2 : i64, tpu.core_type = #tpu.core_type<tc>, window_params = [{pipeline_mode = #tpu.pipeline_mode<synchronous>, transform_indices = @transform_0, window_bounds = array<i64: 8, 128>}, {transform_indices = @transform_1, window_bounds = array<i64: 4, 128>}, {transform_indices = @transform_2, window_bounds = array<i64: 4, 256>}, {transform_indices = @transform_3, window_bounds = array<i64: 4, 128>}, {transform_indices = @transform_4, window_bounds = array<i64: 1, 256>}, {transform_indices = @transform_5, window_bounds = array<i64: 8, 256>}, {transform_indices = @transform_6, window_bounds = array<i64: 1, 8, 1>}, {transform_indices = @transform_7, window_bounds = array<i64: 1, 8, 1>}]} {
    %c0 = arith.constant 0 : index
    %c0_0 = arith.constant 0 : index
    %0 = vector.load %arg2[%c0, %c0_0] : memref<4x128xf32, #tpu.memory_space<vmem>>, vector<4x128xf32>
    %c0_1 = arith.constant 0 : index
    %c0_2 = arith.constant 0 : index
    %1 = vector.load %arg9[%c0_1, %c0_2] : memref<4x512xf32, #tpu.memory_space<vmem>>, vector<4x128xf32>
    tpu.vector_store %arg9[%c0_1, %c0_2], %0 {strides = array<i32>} : memref<4x512xf32, #tpu.memory_space<vmem>>, vector<4x128xf32>,
    %c0_3 = arith.constant 0 : index
    %c0_4 = arith.constant 0 : index
    %2 = vector.load %arg3[%c0_3, %c0_4] : memref<4x256xf32, #tpu.memory_space<vmem>>, vector<4x256xf32>
    %c0_5 = arith.constant 0 : index
    %c128 = arith.constant 128 : index
    %3 = vector.load %arg9[%c0_5, %c128] : memref<4x512xf32, #tpu.memory_space<vmem>>, vector<4x256xf32>
    tpu.vector_store %arg9[%c0_5, %c128], %2 {strides = array<i32>} : memref<4x512xf32, #tpu.memory_space<vmem>>, vector<4x256xf32>,
    %c0_6 = arith.constant 0 : index
    %c0_7 = arith.constant 0 : index
    %4 = vector.load %arg4[%c0_6, %c0_7] : memref<4x128xf32, #tpu.memory_space<vmem>>, vector<4x128xf32>
    %c0_8 = arith.constant 0 : index
    %c384 = arith.constant 384 : index
    %5 = vector.load %arg9[%c0_8, %c384] : memref<4x512xf32, #tpu.memory_space<vmem>>, vector<4x128xf32>
    tpu.vector_store %arg9[%c0_8, %c384], %4 {strides = array<i32>} : memref<4x512xf32, #tpu.memory_space<vmem>>, vector<4x128xf32>,
    %c0_9 = arith.constant 0 : index
    %c85 = arith.constant 85 : index
    %6 = vector.load %arg9[%c0_9, %c85] : memref<4x512xf32, #tpu.memory_space<vmem>>, vector<4x256xf32>
    %c0_10 = arith.constant 0 : index
    %c0_11 = arith.constant 0 : index
    %7 = vector.load %arg10[%c0_10, %c0_11] : memref<128x256xf32, #tpu.memory_space<vmem>>, vector<4x256xf32>
    tpu.vector_store %arg10[%c0_10, %c0_11], %6 {strides = array<i32>} : memref<128x256xf32, #tpu.memory_space<vmem>>, vector<4x256xf32>,
    %c0_12 = arith.constant 0 : index
    %c86 = arith.constant 86 : index
    %8 = vector.load %arg9[%c0_12, %c86] : memref<4x512xf32, #tpu.memory_space<vmem>>, vector<4x256xf32>
    %c4 = arith.constant 4 : index
    %c0_13 = arith.constant 0 : index
    %9 = vector.load %arg10[%c4, %c0_13] : memref<128x256xf32, #tpu.memory_space<vmem>>, vector<4x256xf32>
    tpu.vector_store %arg10[%c4, %c0_13], %8 {strides = array<i32>} : memref<128x256xf32, #tpu.memory_space<vmem>>, vector<4x256xf32>,
    %c0_14 = arith.constant 0 : index
    %c87 = arith.constant 87 : index
    %10 = vector.load %arg9[%c0_14, %c87] : memref<4x512xf32, #tpu.memory_space<vmem>>, vector<4x256xf32>
    %c8 = arith.constant 8 : index
    %c0_15 = arith.constant 0 : index
    %11 = vector.load %arg10[%c8, %c0_15] : memref<128x256xf32, #tpu.memory_space<vmem>>, vector<4x256xf32>
    tpu.vector_store %arg10[%c8, %c0_15], %10 {strides = array<i32>} : memref<128x256xf32, #tpu.memory_space<vmem>>, vector<4x256xf32>,
    %c0_16 = arith.constant 0 : index
    %c91 = arith.constant 91 : index
    %12 = vector.load %arg9[%c0_16, %c91] : memref<4x512xf32, #tpu.memory_space<vmem>>, vector<4x256xf32>
    %c12 = arith.constant 12 : index
    %c0_17 = arith.constant 0 : index
    %13 = vector.load %arg10[%c12, %c0_17] : memref<128x256xf32, #tpu.memory_space<vmem>>, vector<4x256xf32>
    tpu.vector_store %arg10[%c12, %c0_17], %12 {strides = array<i32>} : memref<128x256xf32, #tpu.memory_space<vmem>>, vector<4x256xf32>,
    %c0_18 = arith.constant 0 : index
    %c92 = arith.constant 92 : index
    %14 = vector.load %arg9[%c0_18, %c92] : memref<4x512xf32, #tpu.memory_space<vmem>>, vector<4x256xf32>
    %c16 = arith.constant 16 : index
    %c0_19 = arith.constant 0 : index
    %15 = vector.load %arg10[%c16, %c0_19] : memref<128x256xf32, #tpu.memory_space<vmem>>, vector<4x256xf32>
    tpu.vector_store %arg10[%c16, %c0_19], %14 {strides = array<i32>} : memref<128x256xf32, #tpu.memory_space<vmem>>, vector<4x256xf32>,
    %c0_20 = arith.constant 0 : index
    %c93 = arith.constant 93 : index
    %16 = vector.load %arg9[%c0_20, %c93] : memref<4x512xf32, #tpu.memory_space<vmem>>, vector<4x256xf32>
    %c20 = arith.constant 20 : index
    %c0_21 = arith.constant 0 : index
    %17 = vector.load %arg10[%c20, %c0_21] : memref<128x256xf32, #tpu.memory_space<vmem>>, vector<4x256xf32>
    tpu.vector_store %arg10[%c20, %c0_21], %16 {strides = array<i32>} : memref<128x256xf32, #tpu.memory_space<vmem>>, vector<4x256xf32>,
    %c0_22 = arith.constant 0 : index
    %c97 = arith.constant 97 : index
    %18 = vector.load %arg9[%c0_22, %c97] : memref<4x512xf32, #tpu.memory_space<vmem>>, vector<4x256xf32>
    %c24 = arith.constant 24 : index
    %c0_23 = arith.constant 0 : index
    %19 = vector.load %arg10[%c24, %c0_23] : memref<128x256xf32, #tpu.memory_space<vmem>>, vector<4x256xf32>
    tpu.vector_store %arg10[%c24, %c0_23], %18 {strides = array<i32>} : memref<128x256xf32, #tpu.memory_space<vmem>>, vector<4x256xf32>,
    %c0_24 = arith.constant 0 : index
    %c98 = arith.constant 98 : index
    %20 = vector.load %arg9[%c0_24, %c98] : memref<4x512xf32, #tpu.memory_space<vmem>>, vector<4x256xf32>
    %c28 = arith.constant 28 : index
    %c0_25 = arith.constant 0 : index
    %21 = vector.load %arg10[%c28, %c0_25] : memref<128x256xf32, #tpu.memory_space<vmem>>, vector<4x256xf32>
    tpu.vector_store %arg10[%c28, %c0_25], %20 {strides = array<i32>} : memref<128x256xf32, #tpu.memory_space<vmem>>, vector<4x256xf32>,
    %c0_26 = arith.constant 0 : index
    %c99 = arith.constant 99 : index
    %22 = vector.load %arg9[%c0_26, %c99] : memref<4x512xf32, #tpu.memory_space<vmem>>, vector<4x256xf32>
    %c32 = arith.constant 32 : index
    %c0_27 = arith.constant 0 : index
    %23 = vector.load %arg10[%c32, %c0_27] : memref<128x256xf32, #tpu.memory_space<vmem>>, vector<4x256xf32>
    tpu.vector_store %arg10[%c32, %c0_27], %22 {strides = array<i32>} : memref<128x256xf32, #tpu.memory_space<vmem>>, vector<4x256xf32>,
    %c0_28 = arith.constant 0 : index
    %c121 = arith.constant 121 : index
    %24 = vector.load %arg9[%c0_28, %c121] : memref<4x512xf32, #tpu.memory_space<vmem>>, vector<4x256xf32>
    %c36 = arith.constant 36 : index
    %c0_29 = arith.constant 0 : index
    %25 = vector.load %arg10[%c36, %c0_29] : memref<128x256xf32, #tpu.memory_space<vmem>>, vector<4x256xf32>
    tpu.vector_store %arg10[%c36, %c0_29], %24 {strides = array<i32>} : memref<128x256xf32, #tpu.memory_space<vmem>>, vector<4x256xf32>,
    %c0_30 = arith.constant 0 : index
    %c122 = arith.constant 122 : index
    %26 = vector.load %arg9[%c0_30, %c122] : memref<4x512xf32, #tpu.memory_space<vmem>>, vector<4x256xf32>
    %c40 = arith.constant 40 : index
    %c0_31 = arith.constant 0 : index
    %27 = vector.load %arg10[%c40, %c0_31] : memref<128x256xf32, #tpu.memory_space<vmem>>, vector<4x256xf32>
    tpu.vector_store %arg10[%c40, %c0_31], %26 {strides = array<i32>} : memref<128x256xf32, #tpu.memory_space<vmem>>, vector<4x256xf32>,
    %c0_32 = arith.constant 0 : index
    %c123 = arith.constant 123 : index
    %28 = vector.load %arg9[%c0_32, %c123] : memref<4x512xf32, #tpu.memory_space<vmem>>, vector<4x256xf32>
    %c44 = arith.constant 44 : index
    %c0_33 = arith.constant 0 : index
    %29 = vector.load %arg10[%c44, %c0_33] : memref<128x256xf32, #tpu.memory_space<vmem>>, vector<4x256xf32>
    tpu.vector_store %arg10[%c44, %c0_33], %28 {strides = array<i32>} : memref<128x256xf32, #tpu.memory_space<vmem>>, vector<4x256xf32>,
    %c0_34 = arith.constant 0 : index
    %c127 = arith.constant 127 : index
    %30 = vector.load %arg9[%c0_34, %c127] : memref<4x512xf32, #tpu.memory_space<vmem>>, vector<4x256xf32>
    %c48 = arith.constant 48 : index
    %c0_35 = arith.constant 0 : index
    %31 = vector.load %arg10[%c48, %c0_35] : memref<128x256xf32, #tpu.memory_space<vmem>>, vector<4x256xf32>
    tpu.vector_store %arg10[%c48, %c0_35], %30 {strides = array<i32>} : memref<128x256xf32, #tpu.memory_space<vmem>>, vector<4x256xf32>,
    %c0_36 = arith.constant 0 : index
    %c128_37 = arith.constant 128 : index
    %32 = vector.load %arg9[%c0_36, %c128_37] : memref<4x512xf32, #tpu.memory_space<vmem>>, vector<4x256xf32>
    %c52 = arith.constant 52 : index
    %c0_38 = arith.constant 0 : index
    %33 = vector.load %arg10[%c52, %c0_38] : memref<128x256xf32, #tpu.memory_space<vmem>>, vector<4x256xf32>
    tpu.vector_store %arg10[%c52, %c0_38], %32 {strides = array<i32>} : memref<128x256xf32, #tpu.memory_space<vmem>>, vector<4x256xf32>,
    %c0_39 = arith.constant 0 : index
    %c129 = arith.constant 129 : index
    %34 = vector.load %arg9[%c0_39, %c129] : memref<4x512xf32, #tpu.memory_space<vmem>>, vector<4x256xf32>
    %c56 = arith.constant 56 : index
    %c0_40 = arith.constant 0 : index
    %35 = vector.load %arg10[%c56, %c0_40] : memref<128x256xf32, #tpu.memory_space<vmem>>, vector<4x256xf32>
    tpu.vector_store %arg10[%c56, %c0_40], %34 {strides = array<i32>} : memref<128x256xf32, #tpu.memory_space<vmem>>, vector<4x256xf32>,
    %c0_41 = arith.constant 0 : index
    %c133 = arith.constant 133 : index
    %36 = vector.load %arg9[%c0_41, %c133] : memref<4x512xf32, #tpu.memory_space<vmem>>, vector<4x256xf32>
    %c60 = arith.constant 60 : index
    %c0_42 = arith.constant 0 : index
    %37 = vector.load %arg10[%c60, %c0_42] : memref<128x256xf32, #tpu.memory_space<vmem>>, vector<4x256xf32>
    tpu.vector_store %arg10[%c60, %c0_42], %36 {strides = array<i32>} : memref<128x256xf32, #tpu.memory_space<vmem>>, vector<4x256xf32>,
    %c0_43 = arith.constant 0 : index
    %c134 = arith.constant 134 : index
    %38 = vector.load %arg9[%c0_43, %c134] : memref<4x512xf32, #tpu.memory_space<vmem>>, vector<4x256xf32>
    %c64 = arith.constant 64 : index
    %c0_44 = arith.constant 0 : index
    %39 = vector.load %arg10[%c64, %c0_44] : memref<128x256xf32, #tpu.memory_space<vmem>>, vector<4x256xf32>
    tpu.vector_store %arg10[%c64, %c0_44], %38 {strides = array<i32>} : memref<128x256xf32, #tpu.memory_space<vmem>>, vector<4x256xf32>,
    %c0_45 = arith.constant 0 : index
    %c135 = arith.constant 135 : index
    %40 = vector.load %arg9[%c0_45, %c135] : memref<4x512xf32, #tpu.memory_space<vmem>>, vector<4x256xf32>
    %c68 = arith.constant 68 : index
    %c0_46 = arith.constant 0 : index
    %41 = vector.load %arg10[%c68, %c0_46] : memref<128x256xf32, #tpu.memory_space<vmem>>, vector<4x256xf32>
    tpu.vector_store %arg10[%c68, %c0_46], %40 {strides = array<i32>} : memref<128x256xf32, #tpu.memory_space<vmem>>, vector<4x256xf32>,
    %c0_47 = arith.constant 0 : index
    %c157 = arith.constant 157 : index
    %42 = vector.load %arg9[%c0_47, %c157] : memref<4x512xf32, #tpu.memory_space<vmem>>, vector<4x256xf32>
    %c72 = arith.constant 72 : index
    %c0_48 = arith.constant 0 : index
    %43 = vector.load %arg10[%c72, %c0_48] : memref<128x256xf32, #tpu.memory_space<vmem>>, vector<4x256xf32>
    tpu.vector_store %arg10[%c72, %c0_48], %42 {strides = array<i32>} : memref<128x256xf32, #tpu.memory_space<vmem>>, vector<4x256xf32>,
    %c0_49 = arith.constant 0 : index
    %c158 = arith.constant 158 : index
    %44 = vector.load %arg9[%c0_49, %c158] : memref<4x512xf32, #tpu.memory_space<vmem>>, vector<4x256xf32>
    %c76 = arith.constant 76 : index
    %c0_50 = arith.constant 0 : index
    %45 = vector.load %arg10[%c76, %c0_50] : memref<128x256xf32, #tpu.memory_space<vmem>>, vector<4x256xf32>
    tpu.vector_store %arg10[%c76, %c0_50], %44 {strides = array<i32>} : memref<128x256xf32, #tpu.memory_space<vmem>>, vector<4x256xf32>,
    %c0_51 = arith.constant 0 : index
    %c159 = arith.constant 159 : index
    %46 = vector.load %arg9[%c0_51, %c159] : memref<4x512xf32, #tpu.memory_space<vmem>>, vector<4x256xf32>
    %c80 = arith.constant 80 : index
    %c0_52 = arith.constant 0 : index
    %47 = vector.load %arg10[%c80, %c0_52] : memref<128x256xf32, #tpu.memory_space<vmem>>, vector<4x256xf32>
    tpu.vector_store %arg10[%c80, %c0_52], %46 {strides = array<i32>} : memref<128x256xf32, #tpu.memory_space<vmem>>, vector<4x256xf32>,
    %c0_53 = arith.constant 0 : index
    %c163 = arith.constant 163 : index
    %48 = vector.load %arg9[%c0_53, %c163] : memref<4x512xf32, #tpu.memory_space<vmem>>, vector<4x256xf32>
    %c84 = arith.constant 84 : index
    %c0_54 = arith.constant 0 : index
    %49 = vector.load %arg10[%c84, %c0_54] : memref<128x256xf32, #tpu.memory_space<vmem>>, vector<4x256xf32>
    tpu.vector_store %arg10[%c84, %c0_54], %48 {strides = array<i32>} : memref<128x256xf32, #tpu.memory_space<vmem>>, vector<4x256xf32>,
    %c0_55 = arith.constant 0 : index
    %c164 = arith.constant 164 : index
    %50 = vector.load %arg9[%c0_55, %c164] : memref<4x512xf32, #tpu.memory_space<vmem>>, vector<4x256xf32>
    %c88 = arith.constant 88 : index
    %c0_56 = arith.constant 0 : index
    %51 = vector.load %arg10[%c88, %c0_56] : memref<128x256xf32, #tpu.memory_space<vmem>>, vector<4x256xf32>
    tpu.vector_store %arg10[%c88, %c0_56], %50 {strides = array<i32>} : memref<128x256xf32, #tpu.memory_space<vmem>>, vector<4x256xf32>,
    %c0_57 = arith.constant 0 : index
    %c165 = arith.constant 165 : index
    %52 = vector.load %arg9[%c0_57, %c165] : memref<4x512xf32, #tpu.memory_space<vmem>>, vector<4x256xf32>
    %c92_58 = arith.constant 92 : index
    %c0_59 = arith.constant 0 : index
    %53 = vector.load %arg10[%c92_58, %c0_59] : memref<128x256xf32, #tpu.memory_space<vmem>>, vector<4x256xf32>
    tpu.vector_store %arg10[%c92_58, %c0_59], %52 {strides = array<i32>} : memref<128x256xf32, #tpu.memory_space<vmem>>, vector<4x256xf32>,
    %c0_60 = arith.constant 0 : index
    %c169 = arith.constant 169 : index
    %54 = vector.load %arg9[%c0_60, %c169] : memref<4x512xf32, #tpu.memory_space<vmem>>, vector<4x256xf32>
    %c96 = arith.constant 96 : index
    %c0_61 = arith.constant 0 : index
    %55 = vector.load %arg10[%c96, %c0_61] : memref<128x256xf32, #tpu.memory_space<vmem>>, vector<4x256xf32>
    tpu.vector_store %arg10[%c96, %c0_61], %54 {strides = array<i32>} : memref<128x256xf32, #tpu.memory_space<vmem>>, vector<4x256xf32>,
    %c0_62 = arith.constant 0 : index
    %c170 = arith.constant 170 : index
    %56 = vector.load %arg9[%c0_62, %c170] : memref<4x512xf32, #tpu.memory_space<vmem>>, vector<4x256xf32>
    %c100 = arith.constant 100 : index
    %c0_63 = arith.constant 0 : index
    %57 = vector.load %arg10[%c100, %c0_63] : memref<128x256xf32, #tpu.memory_space<vmem>>, vector<4x256xf32>
    tpu.vector_store %arg10[%c100, %c0_63], %56 {strides = array<i32>} : memref<128x256xf32, #tpu.memory_space<vmem>>, vector<4x256xf32>,
    %c0_64 = arith.constant 0 : index
    %c171 = arith.constant 171 : index
    %58 = vector.load %arg9[%c0_64, %c171] : memref<4x512xf32, #tpu.memory_space<vmem>>, vector<4x256xf32>
    %c104 = arith.constant 104 : index
    %c0_65 = arith.constant 0 : index
    %59 = vector.load %arg10[%c104, %c0_65] : memref<128x256xf32, #tpu.memory_space<vmem>>, vector<4x256xf32>
    tpu.vector_store %arg10[%c104, %c0_65], %58 {strides = array<i32>} : memref<128x256xf32, #tpu.memory_space<vmem>>, vector<4x256xf32>,
    %cst = arith.constant 0.000000e+00 : f32
    %60 = vector.broadcast %cst : f32 to vector<20x256xf32>
    %c108 = arith.constant 108 : index
    %c0_66 = arith.constant 0 : index
    %61 = vector.load %arg10[%c108, %c0_66] : memref<128x256xf32, #tpu.memory_space<vmem>>, vector<20x256xf32>
    tpu.vector_store %arg10[%c108, %c0_66], %60 {strides = array<i32>} : memref<128x256xf32, #tpu.memory_space<vmem>>, vector<20x256xf32>,
    %c0_67 = arith.constant 0 : index
    %c0_68 = arith.constant 0 : index
    %62 = vector.load %arg1[%c0_67, %c0_68] : memref<8x128xf32, #tpu.memory_space<vmem>>, vector<8x128xf32>
    %c0_69 = arith.constant 0 : index
    %c0_70 = arith.constant 0 : index
    %63 = vector.load %arg10[%c0_69, %c0_70] : memref<128x256xf32, #tpu.memory_space<vmem>>, vector<128x256xf32>
    %cst_71 = arith.constant dense<0.000000e+00> : vector<8x256xf32>
    %64 = tpu.matmul %62, %63, %cst_71 {dimension_numbers = #tpu.dot_dimension_numbers<[1], [0], [0], [1], [0, 0, 1, 1], [], []>} : vector<8x128xf32>, vector<128x256xf32>, vector<8x256xf32> -> vector<8x256xf32>
    %c0_72 = arith.constant 0 : index
    %c0_73 = arith.constant 0 : index
    %65 = vector.load %arg5[%c0_72, %c0_73] : memref<1x256xf32, #tpu.memory_space<vmem>>, vector<1x256xf32>
    %66 = vector.broadcast %65 : vector<1x256xf32> to vector<8x256xf32>
    %67 = arith.mulf %64, %66 : vector<8x256xf32>
    %c0_74 = arith.constant 0 : index
    %c0_75 = arith.constant 0 : index
    %68 = vector.load %arg6[%c0_74, %c0_75] : memref<8x256xf32, #tpu.memory_space<vmem>>, vector<8x256xf32>
    tpu.vector_store %arg6[%c0_74, %c0_75], %67 {strides = array<i32>} : memref<8x256xf32, #tpu.memory_space<vmem>>, vector<8x256xf32>,
    %cst_76 = arith.constant dense<0.000000e+00> : vector<8xf32>
    %69 = vector.multi_reduction <add>, %67, %cst_76 [1] : vector<8x256xf32> to vector<8xf32>
    %70 = vector.shape_cast %69 : vector<8xf32> to vector<8x1xf32>
    %c0_77 = arith.constant 0 : index
    %c0_78 = arith.constant 0 : index
    %c0_79 = arith.constant 0 : index
    %71 = vector.load %arg7[%c0_77, %c0_78, %c0_79] : memref<1x8x1xf32, #tpu.memory_space<vmem>>, vector<1x8x1xf32>
    %72 = vector.shape_cast %71 : vector<1x8x1xf32> to vector<8x1xf32>
    %73 = vector.shape_cast %70 : vector<8x1xf32> to vector<1x8x1xf32>
    tpu.vector_store %arg7[%c0_77, %c0_78, %c0_79], %73 {strides = array<i32>} : memref<1x8x1xf32, #tpu.memory_space<vmem>>, vector<1x8x1xf32>,
    %74 = arith.mulf %67, %67 : vector<8x256xf32>
    %cst_80 = arith.constant dense<0.000000e+00> : vector<8xf32>
    %75 = vector.multi_reduction <add>, %74, %cst_80 [1] : vector<8x256xf32> to vector<8xf32>
    %76 = vector.shape_cast %75 : vector<8xf32> to vector<8x1xf32>
    %c0_81 = arith.constant 0 : index
    %c0_82 = arith.constant 0 : index
    %c0_83 = arith.constant 0 : index
    %77 = vector.load %arg8[%c0_81, %c0_82, %c0_83] : memref<1x8x1xf32, #tpu.memory_space<vmem>>, vector<1x8x1xf32>
    %78 = vector.shape_cast %77 : vector<1x8x1xf32> to vector<8x1xf32>
    %79 = vector.shape_cast %76 : vector<8x1xf32> to vector<1x8x1xf32>
    tpu.vector_store %arg8[%c0_81, %c0_82, %c0_83], %79 {strides = array<i32>} : memref<1x8x1xf32, #tpu.memory_space<vmem>>, vector<1x8x1xf32>,
    return
  }
  func.func @transform_0(%arg0: i32) -> (i32, i32) {
    %c0_i32 = arith.constant 0 : i32
    %c0_i32_0 = arith.constant 0 : i32
    %c0_i32_1 = arith.constant 0 : i32
    return %c0_i32, %c0_i32_0 : i32, i32
  }
  func.func @transform_1(%arg0: i32) -> (i32, i32) {
    %c2_i32 = arith.constant 2 : i32
    %0 = arith.muli %arg0, %c2_i32 : i32
    %c1_i32 = arith.constant 1 : i32
    %1 = arith.subi %0, %c1_i32 : i32
    %c0_i32 = arith.constant 0 : i32
    %2 = arith.maxsi %1, %c0_i32 : i32
    %c0_i32_0 = arith.constant 0 : i32
    %c0_i32_1 = arith.constant 0 : i32
    return %c0_i32_0, %2 : i32, i32
  }
  func.func @transform_2(%arg0: i32) -> (i32, i32) {
    %c0_i32 = arith.constant 0 : i32
    %c0_i32_0 = arith.constant 0 : i32
    return %c0_i32, %arg0 : i32, i32
  }
  func.func @transform_3(%arg0: i32) -> (i32, i32) {
    %c1_i32 = arith.constant 1 : i32
    %0 = arith.addi %arg0, %c1_i32 : i32
    %c2_i32 = arith.constant 2 : i32
    %1 = arith.muli %0, %c2_i32 : i32
    %c3_i32 = arith.constant 3 : i32
    %2 = arith.minsi %1, %c3_i32 : i32
    %c0_i32 = arith.constant 0 : i32
    %c0_i32_0 = arith.constant 0 : i32
    return %c0_i32, %2 : i32, i32
  }
  func.func @transform_4(%arg0: i32) -> (i32, i32) {
    %c0_i32 = arith.constant 0 : i32
    %c0_i32_0 = arith.constant 0 : i32
    return %c0_i32, %arg0 : i32, i32
  }
  func.func @transform_5(%arg0: i32) -> (i32, i32) {
    %c0_i32 = arith.constant 0 : i32
    %c0_i32_0 = arith.constant 0 : i32
    return %c0_i32, %arg0 : i32, i32
  }
  func.func @transform_6(%arg0: i32) -> (i32, i32, i32) {
    %c0_i32 = arith.constant 0 : i32
    %c0_i32_0 = arith.constant 0 : i32
    %c0_i32_1 = arith.constant 0 : i32
    return %arg0, %c0_i32, %c0_i32_0 : i32, i32, i32
  }
  func.func @transform_7(%arg0: i32) -> (i32, i32, i32) {
    %c0_i32 = arith.constant 0 : i32
    %c0_i32_0 = arith.constant 0 : i32
    %c0_i32_1 = arith.constant 0 : i32
    return %arg0, %c0_i32, %c0_i32_0 : i32, i32, i32
  }
}

module attributes {stable_mosaic.version = 11 : i64} {
  func.func @_child_stats_kernel(%arg0: i32, %arg1: memref<8x256xf32, #tpu.memory_space<vmem>>, %arg2: memref<8x1xf32, #tpu.memory_space<vmem>>, %arg3: memref<8x1xf32, #tpu.memory_space<vmem>>, %arg4: memref<1x8x8xf32, #tpu.memory_space<vmem>>, %arg5: memref<1x8x1xf32, #tpu.memory_space<vmem>>) attributes {dimension_semantics = [#tpu.dimension_semantics<parallel>], iteration_bounds = array<i64: 2>, scalar_prefetch = 0 : i64, scratch_operands = 0 : i64, tpu.core_type = #tpu.core_type<tc>, window_params = [{transform_indices = @transform_0, window_bounds = array<i64: 8, 256>}, {pipeline_mode = #tpu.pipeline_mode<synchronous>, transform_indices = @transform_1, window_bounds = array<i64: 8, 1>}, {pipeline_mode = #tpu.pipeline_mode<synchronous>, transform_indices = @transform_2, window_bounds = array<i64: 8, 1>}, {transform_indices = @transform_3, window_bounds = array<i64: 1, 8, 8>}, {transform_indices = @transform_4, window_bounds = array<i64: 1, 8, 1>}]} {
    %c0 = arith.constant 0 : index
    %c0_0 = arith.constant 0 : index
    %0 = vector.load %arg1[%c0, %c0_0] : memref<8x256xf32, #tpu.memory_space<vmem>>, vector<8x256xf32>
    %c0_1 = arith.constant 0 : index
    %c0_2 = arith.constant 0 : index
    %1 = vector.load %arg2[%c0_1, %c0_2] : memref<8x1xf32, #tpu.memory_space<vmem>>, vector<8x1xf32>
    %2 = vector.broadcast %1 : vector<8x1xf32> to vector<8x256xf32>
    %3 = arith.mulf %0, %2 : vector<8x256xf32>
    %c0_3 = arith.constant 0 : index
    %c0_4 = arith.constant 0 : index
    %4 = vector.load %arg3[%c0_3, %c0_4] : memref<8x1xf32, #tpu.memory_space<vmem>>, vector<8x1xf32>
    %5 = vector.broadcast %4 : vector<8x1xf32> to vector<8x256xf32>
    %6 = arith.addf %3, %5 : vector<8x256xf32>
    %cst = arith.constant 0.000000e+00 : f32
    %7 = vector.broadcast %cst : f32 to vector<8x256xf32>
    %8 = arith.cmpf ogt, %6, %7 : vector<8x256xf32>
    %cst_5 = arith.constant 0.000000e+00 : f32
    %9 = vector.broadcast %cst_5 : f32 to vector<8x256xf32>
    %10 = arith.minimumf %6, %9 : vector<8x256xf32>
    %11 = math.exp %10 : vector<8x256xf32>
    %cst_6 = arith.constant 1.000000e+00 : f32
    %12 = vector.broadcast %cst_6 : f32 to vector<8x256xf32>
    %13 = arith.subf %11, %12 : vector<8x256xf32>
    %14 = arith.select %8, %6, %13 : vector<8x256xi1>, vector<8x256xf32>
    %cst_7 = arith.constant dense<0.000000e+00> : vector<8x8xf32>
    %15 = tpu.matmul %14, %14, %cst_7 {dimension_numbers = #tpu.dot_dimension_numbers<[1], [1], [0], [0], [0, 0, 1, 0], [], []>} : vector<8x256xf32>, vector<8x256xf32>, vector<8x8xf32> -> vector<8x8xf32>
    %c0_8 = arith.constant 0 : index
    %c0_9 = arith.constant 0 : index
    %c0_10 = arith.constant 0 : index
    %16 = vector.load %arg4[%c0_8, %c0_9, %c0_10] : memref<1x8x8xf32, #tpu.memory_space<vmem>>, vector<1x8x8xf32>
    %17 = vector.shape_cast %16 : vector<1x8x8xf32> to vector<8x8xf32>
    %18 = vector.shape_cast %15 : vector<8x8xf32> to vector<1x8x8xf32>
    tpu.vector_store %arg4[%c0_8, %c0_9, %c0_10], %18 {strides = array<i32>} : memref<1x8x8xf32, #tpu.memory_space<vmem>>, vector<1x8x8xf32>,
    %cst_11 = arith.constant dense<0.000000e+00> : vector<8xf32>
    %19 = vector.multi_reduction <add>, %14, %cst_11 [1] : vector<8x256xf32> to vector<8xf32>
    %20 = vector.shape_cast %19 : vector<8xf32> to vector<8x1xf32>
    %c0_12 = arith.constant 0 : index
    %c0_13 = arith.constant 0 : index
    %c0_14 = arith.constant 0 : index
    %21 = vector.load %arg5[%c0_12, %c0_13, %c0_14] : memref<1x8x1xf32, #tpu.memory_space<vmem>>, vector<1x8x1xf32>
    %22 = vector.shape_cast %21 : vector<1x8x1xf32> to vector<8x1xf32>
    %23 = vector.shape_cast %20 : vector<8x1xf32> to vector<1x8x1xf32>
    tpu.vector_store %arg5[%c0_12, %c0_13, %c0_14], %23 {strides = array<i32>} : memref<1x8x1xf32, #tpu.memory_space<vmem>>, vector<1x8x1xf32>,
    return
  }
  func.func @transform_0(%arg0: i32) -> (i32, i32) {
    %c0_i32 = arith.constant 0 : i32
    %c0_i32_0 = arith.constant 0 : i32
    return %c0_i32, %arg0 : i32, i32
  }
  func.func @transform_1(%arg0: i32) -> (i32, i32) {
    %c0_i32 = arith.constant 0 : i32
    %c0_i32_0 = arith.constant 0 : i32
    %c0_i32_1 = arith.constant 0 : i32
    return %c0_i32, %c0_i32_0 : i32, i32
  }
  func.func @transform_2(%arg0: i32) -> (i32, i32) {
    %c0_i32 = arith.constant 0 : i32
    %c0_i32_0 = arith.constant 0 : i32
    %c0_i32_1 = arith.constant 0 : i32
    return %c0_i32, %c0_i32_0 : i32, i32
  }
  func.func @transform_3(%arg0: i32) -> (i32, i32, i32) {
    %c0_i32 = arith.constant 0 : i32
    %c0_i32_0 = arith.constant 0 : i32
    %c0_i32_1 = arith.constant 0 : i32
    return %arg0, %c0_i32, %c0_i32_0 : i32, i32, i32
  }
  func.func @transform_4(%arg0: i32) -> (i32, i32, i32) {
    %c0_i32 = arith.constant 0 : i32
    %c0_i32_0 = arith.constant 0 : i32
    %c0_i32_1 = arith.constant 0 : i32
    return %arg0, %c0_i32, %c0_i32_0 : i32, i32, i32
  }
}

module attributes {stable_mosaic.version = 11 : i64} {
  func.func @_child_out_kernel(%arg0: i32, %arg1: memref<8x256xf32, #tpu.memory_space<vmem>>, %arg2: memref<8x1xf32, #tpu.memory_space<vmem>>, %arg3: memref<8x1xf32, #tpu.memory_space<vmem>>, %arg4: memref<32x8xf32, #tpu.memory_space<vmem>>, %arg5: memref<32x1xf32, #tpu.memory_space<vmem>>, %arg6: memref<32x1xf32, #tpu.memory_space<vmem>>, %arg7: memref<32x256xf32, #tpu.memory_space<vmem>>) attributes {dimension_semantics = [#tpu.dimension_semantics<parallel>], iteration_bounds = array<i64: 2>, scalar_prefetch = 0 : i64, scratch_operands = 0 : i64, tpu.core_type = #tpu.core_type<tc>, window_params = [{transform_indices = @transform_0, window_bounds = array<i64: 8, 256>}, {pipeline_mode = #tpu.pipeline_mode<synchronous>, transform_indices = @transform_1, window_bounds = array<i64: 8, 1>}, {pipeline_mode = #tpu.pipeline_mode<synchronous>, transform_indices = @transform_2, window_bounds = array<i64: 8, 1>}, {pipeline_mode = #tpu.pipeline_mode<synchronous>, transform_indices = @transform_3, window_bounds = array<i64: 32, 8>}, {pipeline_mode = #tpu.pipeline_mode<synchronous>, transform_indices = @transform_4, window_bounds = array<i64: 32, 1>}, {pipeline_mode = #tpu.pipeline_mode<synchronous>, transform_indices = @transform_5, window_bounds = array<i64: 32, 1>}, {transform_indices = @transform_6, window_bounds = array<i64: 32, 256>}]} {
    %c0 = arith.constant 0 : index
    %c0_0 = arith.constant 0 : index
    %0 = vector.load %arg1[%c0, %c0_0] : memref<8x256xf32, #tpu.memory_space<vmem>>, vector<8x256xf32>
    %c0_1 = arith.constant 0 : index
    %c0_2 = arith.constant 0 : index
    %1 = vector.load %arg2[%c0_1, %c0_2] : memref<8x1xf32, #tpu.memory_space<vmem>>, vector<8x1xf32>
    %2 = vector.broadcast %1 : vector<8x1xf32> to vector<8x256xf32>
    %3 = arith.mulf %0, %2 : vector<8x256xf32>
    %c0_3 = arith.constant 0 : index
    %c0_4 = arith.constant 0 : index
    %4 = vector.load %arg3[%c0_3, %c0_4] : memref<8x1xf32, #tpu.memory_space<vmem>>, vector<8x1xf32>
    %5 = vector.broadcast %4 : vector<8x1xf32> to vector<8x256xf32>
    %6 = arith.addf %3, %5 : vector<8x256xf32>
    %cst = arith.constant 0.000000e+00 : f32
    %7 = vector.broadcast %cst : f32 to vector<8x256xf32>
    %8 = arith.cmpf ogt, %6, %7 : vector<8x256xf32>
    %cst_5 = arith.constant 0.000000e+00 : f32
    %9 = vector.broadcast %cst_5 : f32 to vector<8x256xf32>
    %10 = arith.minimumf %6, %9 : vector<8x256xf32>
    %11 = math.exp %10 : vector<8x256xf32>
    %cst_6 = arith.constant 1.000000e+00 : f32
    %12 = vector.broadcast %cst_6 : f32 to vector<8x256xf32>
    %13 = arith.subf %11, %12 : vector<8x256xf32>
    %14 = arith.select %8, %6, %13 : vector<8x256xi1>, vector<8x256xf32>
    %c0_7 = arith.constant 0 : index
    %c0_8 = arith.constant 0 : index
    %15 = vector.load %arg4[%c0_7, %c0_8] : memref<32x8xf32, #tpu.memory_space<vmem>>, vector<32x8xf32>
    %cst_9 = arith.constant dense<0.000000e+00> : vector<32x256xf32>
    %16 = tpu.matmul %15, %14, %cst_9 {dimension_numbers = #tpu.dot_dimension_numbers<[1], [0], [0], [1], [0, 0, 1, 1], [], []>} : vector<32x8xf32>, vector<8x256xf32>, vector<32x256xf32> -> vector<32x256xf32>
    %c0_10 = arith.constant 0 : index
    %c0_11 = arith.constant 0 : index
    %17 = vector.load %arg5[%c0_10, %c0_11] : memref<32x1xf32, #tpu.memory_space<vmem>>, vector<32x1xf32>
    %18 = vector.broadcast %17 : vector<32x1xf32> to vector<32x256xf32>
    %19 = arith.mulf %16, %18 : vector<32x256xf32>
    %c0_12 = arith.constant 0 : index
    %c0_13 = arith.constant 0 : index
    %20 = vector.load %arg6[%c0_12, %c0_13] : memref<32x1xf32, #tpu.memory_space<vmem>>, vector<32x1xf32>
    %21 = vector.broadcast %20 : vector<32x1xf32> to vector<32x256xf32>
    %22 = arith.addf %19, %21 : vector<32x256xf32>
    %cst_14 = arith.constant 0.000000e+00 : f32
    %23 = vector.broadcast %cst_14 : f32 to vector<32x256xf32>
    %24 = arith.cmpf ogt, %22, %23 : vector<32x256xf32>
    %cst_15 = arith.constant 0.000000e+00 : f32
    %25 = vector.broadcast %cst_15 : f32 to vector<32x256xf32>
    %26 = arith.minimumf %22, %25 : vector<32x256xf32>
    %27 = math.exp %26 : vector<32x256xf32>
    %cst_16 = arith.constant 1.000000e+00 : f32
    %28 = vector.broadcast %cst_16 : f32 to vector<32x256xf32>
    %29 = arith.subf %27, %28 : vector<32x256xf32>
    %30 = arith.select %24, %22, %29 : vector<32x256xi1>, vector<32x256xf32>
    %c0_17 = arith.constant 0 : index
    %c0_18 = arith.constant 0 : index
    %31 = vector.load %arg7[%c0_17, %c0_18] : memref<32x256xf32, #tpu.memory_space<vmem>>, vector<32x256xf32>
    tpu.vector_store %arg7[%c0_17, %c0_18], %30 {strides = array<i32>} : memref<32x256xf32, #tpu.memory_space<vmem>>, vector<32x256xf32>,
    return
  }
  func.func @transform_0(%arg0: i32) -> (i32, i32) {
    %c0_i32 = arith.constant 0 : i32
    %c0_i32_0 = arith.constant 0 : i32
    return %c0_i32, %arg0 : i32, i32
  }
  func.func @transform_1(%arg0: i32) -> (i32, i32) {
    %c0_i32 = arith.constant 0 : i32
    %c0_i32_0 = arith.constant 0 : i32
    %c0_i32_1 = arith.constant 0 : i32
    return %c0_i32, %c0_i32_0 : i32, i32
  }
  func.func @transform_2(%arg0: i32) -> (i32, i32) {
    %c0_i32 = arith.constant 0 : i32
    %c0_i32_0 = arith.constant 0 : i32
    %c0_i32_1 = arith.constant 0 : i32
    return %c0_i32, %c0_i32_0 : i32, i32
  }
  func.func @transform_3(%arg0: i32) -> (i32, i32) {
    %c0_i32 = arith.constant 0 : i32
    %c0_i32_0 = arith.constant 0 : i32
    %c0_i32_1 = arith.constant 0 : i32
    return %c0_i32, %c0_i32_0 : i32, i32
  }
  func.func @transform_4(%arg0: i32) -> (i32, i32) {
    %c0_i32 = arith.constant 0 : i32
    %c0_i32_0 = arith.constant 0 : i32
    %c0_i32_1 = arith.constant 0 : i32
    return %c0_i32, %c0_i32_0 : i32, i32
  }
  func.func @transform_5(%arg0: i32) -> (i32, i32) {
    %c0_i32 = arith.constant 0 : i32
    %c0_i32_0 = arith.constant 0 : i32
    %c0_i32_1 = arith.constant 0 : i32
    return %c0_i32, %c0_i32_0 : i32, i32
  }
  func.func @transform_6(%arg0: i32) -> (i32, i32) {
    %c0_i32 = arith.constant 0 : i32
    %c0_i32_0 = arith.constant 0 : i32
    return %c0_i32, %arg0 : i32, i32
  }
}

</mosaic_0001>

<llo_original>
// kernel: node_decoder_forward.4
$region0: #{node_decoder_forward.4}
  #allocation0 [shape = 'u32[]', space=smem, size = 0x4, offset = 0x4, fixed_abs, tag = 'smem constant byte address 0x4 - core index']
  #allocation1 [shape = 'u32[144,128]{1,0:T(1,128)}', space=vmem, size = 0x12000, scoped, tag = 'internal scratch']
  %s0 = inlined_call_operand.vmem [shape: f32[8,512], index: 0, kind: input, shape index: {}]
  %s1 = inlined_call_operand.vmem [shape: f32[8,1], index: 1, kind: input, shape index: {}]
  %s2 = inlined_call_operand.vmem [shape: f32[8,1], index: 2, kind: input, shape index: {}]
  %s3 = inlined_call_operand.vmem [shape: f32[2,8,8], index: 3, kind: output, shape index: {0}]
  %s4 = inlined_call_operand.vmem [shape: f32[2,8,1], index: 4, kind: output, shape index: {1}]
  %5 = xla_tuple %s3, %s4
  %s6 = sld [smem:[#allocation0]]
  $region53: #{node_decoder_forward.4} parent=0
    _
  %s8 = ssub.s32 1, %s6
  %s9 = scalar_select 0, %s8, %s6
  loop: start=0, step=1, limit=4
  $region2: #{node_decoder_forward.4} parent=0 // loop_pre_header
    _
  $region3: #{node_decoder_forward.4} parent=0 // loop_header
    %s11 = sphi 0, %s15
    %p12 = scmp.ge.s32.totalorder %s11, 4
    %s21 = sphi 0, %s23
    %s24 = sphi 0, %s21
    %s25 = sphi 0, %s24
    %s41 = sphi 0, %s25
    %s45 = sphi 0, %s45
    %s47 = sphi 0, %s45
    %s48 = sphi 0, %s47
    %s62 = sphi 0, %s48
    %s66 = sphi 0, %s66
    %s68 = sphi 0, %s66
    %s69 = sphi 0, %s68
    %s83 = sphi 0, %s69
    %s89 = sphi 0, %s91
    %s92 = sphi 0, %s89
    %s93 = sphi 0, %s92
    %s109 = sphi 0, %s93
    %s115 = sphi 0, %s117
    %s118 = sphi 0, %s115
    %s119 = sphi 0, %s118
    %s135 = sphi 0, %s119
  $region4: #{node_decoder_forward.4} parent=0 // loop_header_branch
    %14 = sbr.rel (%p12) target = $region8
  $region5: #{node_decoder_forward.4} parent=0 // loop_body
    %s16 = ssub.s32 %s11, 1
    %s17 = ssub.s32 %s11, 2
    %s18 = sadd.s32 %s11, 1
    %s19 = ssub.s32 %s11, %s18
    %p20 = scmp.eq.s32.totalorder %s19, 0
    %s22 = sadd.s32 %s21, 1
    %s23 = scalar_select %p20, %s21, %s22
    %p26 = pneg %p20
    %p27 = scmp.eq.s32.totalorder %s11, 1
    %p28 = por %p26, %p27
    %p29 = scmp.ne.s32.totalorder %s21, %s24
    %p30 = scmp.eq.s32.totalorder %s11, 0
    %p31 = por %p29, %p30
    %p32 = scmp.ne.s32.totalorder %s21, %s24
    %p33 = scmp.eq.s32.totalorder %s16, 1
    %p34 = por %p32, %p33
    %p35 = scmp.ne.s32.totalorder %s24, %s25
    %p36 = scmp.eq.s32.totalorder %s16, 0
    %p37 = por %p35, %p36
    %p38 = scmp.ne.s32.totalorder %s24, %s25
    %p39 = scmp.eq.s32.totalorder %s17, 1
    %p40 = por %p38, %p39
    %p42 = scmp.ne.s32.totalorder %s25, %s41
    %p43 = scmp.eq.s32.totalorder %s17, 0
    %p44 = por %p42, %p43
    %s46 = sadd.s32 %s45, 1
    %p49 = scmp.eq.s32.totalorder %s11, 1
    %p50 = scmp.ne.s32.totalorder %s45, %s47
    %p51 = scmp.eq.s32.totalorder %s11, 0
    %p52 = por %p50, %p51
    %p53 = scmp.ne.s32.totalorder %s45, %s47
    %p54 = scmp.eq.s32.totalorder %s16, 1
    %p55 = por %p53, %p54
    %p56 = scmp.ne.s32.totalorder %s47, %s48
    %p57 = scmp.eq.s32.totalorder %s16, 0
    %p58 = por %p56, %p57
    %p59 = scmp.ne.s32.totalorder %s47, %s48
    %p60 = scmp.eq.s32.totalorder %s17, 1
    %p61 = por %p59, %p60
    %p63 = scmp.ne.s32.totalorder %s48, %s62
    %p64 = scmp.eq.s32.totalorder %s17, 0
    %p65 = por %p63, %p64
    %s67 = sadd.s32 %s66, 1
    %p70 = scmp.eq.s32.totalorder %s11, 1
    %p71 = scmp.ne.s32.totalorder %s66, %s68
    %p72 = scmp.eq.s32.totalorder %s11, 0
    %p73 = por %p71, %p72
    %p74 = scmp.ne.s32.totalorder %s66, %s68
    %p75 = scmp.eq.s32.totalorder %s16, 1
    %p76 = por %p74, %p75
    %p77 = scmp.ne.s32.totalorder %s68, %s69
    %p78 = scmp.eq.s32.totalorder %s16, 0
    %p79 = por %p77, %p78
    %p80 = scmp.ne.s32.totalorder %s68, %s69
    %p81 = scmp.eq.s32.totalorder %s17, 1
    %p82 = por %p80, %p81
    %p84 = scmp.ne.s32.totalorder %s69, %s83
    %p85 = scmp.eq.s32.totalorder %s17, 0
    %p86 = por %p84, %p85
    %s87 = ssub.s32 %s11, %s18
    %p88 = scmp.eq.s32.totalorder %s87, 0
    %s90 = sadd.s32 %s89, 1
    %s91 = scalar_select %p88, %s89, %s90
    %p94 = pneg %p88
    %p95 = scmp.eq.s32.totalorder %s11, 1
    %p96 = por %p94, %p95
    %p97 = scmp.ne.s32.totalorder %s89, %s92
    %p98 = scmp.eq.s32.totalorder %s11, 0
    %p99 = por %p97, %p98
    %p100 = scmp.ne.s32.totalorder %s89, %s92
    %p101 = scmp.eq.s32.totalorder %s16, 1
    %p102 = por %p100, %p101
    %p103 = scmp.ne.s32.totalorder %s92, %s93
    %p104 = scmp.eq.s32.totalorder %s16, 0
    %p105 = por %p103, %p104
    %p106 = scmp.ne.s32.totalorder %s92, %s93
    %p107 = scmp.eq.s32.totalorder %s17, 1
    %p108 = por %p106, %p107
    %p110 = scmp.ne.s32.totalorder %s93, %s109
    %p111 = scmp.eq.s32.totalorder %s17, 0
    %p112 = por %p110, %p111
    %s113 = ssub.s32 %s11, %s18
    %p114 = scmp.eq.s32.totalorder %s113, 0
    %s116 = sadd.s32 %s115, 1
    %s117 = scalar_select %p114, %s115, %s116
    %p120 = pneg %p114
    %p121 = scmp.eq.s32.totalorder %s11, 1
    %p122 = por %p120, %p121
    %p123 = scmp.ne.s32.totalorder %s115, %s118
    %p124 = scmp.eq.s32.totalorder %s11, 0
    %p125 = por %p123, %p124
    %p126 = scmp.ne.s32.totalorder %s115, %s118
    %p127 = scmp.eq.s32.totalorder %s16, 1
    %p128 = por %p126, %p127
    %p129 = scmp.ne.s32.totalorder %s118, %s119
    %p130 = scmp.eq.s32.totalorder %s16, 0
    %p131 = por %p129, %p130
    %p132 = scmp.ne.s32.totalorder %s118, %s119
    %p133 = scmp.eq.s32.totalorder %s17, 1
    %p134 = por %p132, %p133
    %p136 = scmp.ne.s32.totalorder %s119, %s135
    %p137 = scmp.eq.s32.totalorder %s17, 0
    %p138 = por %p136, %p137
    %p139 = scmp.le.s32.totalorder 1, %s11
    %p140 = scmp.lt.s32.totalorder %s11, 3
    %p141 = pnand %p139, %p140
    %p142 = pneg %p141
    // Predicated region
    $region9: #{node_decoder_forward.4} parent=5 // pred_check
      _
    $region10: #{node_decoder_forward.4} parent=5 // pred_check_branch
      %144 = sbr.rel (%p141) target = $region12
    $region11: #{node_decoder_forward.4} parent=5 // pred_region
      %s145 = ssub.s32 %s11, 1
      // Predicated region
      $region13: #{node_decoder_forward.4} parent=11 // pred_check
        %p146 = pneg %p58
      $region14: #{node_decoder_forward.4} parent=11 // pred_check_branch
        %148 = sbr.rel (%p146) target = $region16
      $region15: #{node_decoder_forward.4} parent=11 // pred_region
        _
      $region16: #{node_decoder_forward.4} parent=11 // pred_fallthru
        _
      // Predicated region
      $region17: #{node_decoder_forward.4} parent=11 // pred_check
        %p149 = pneg %p79
      $region18: #{node_decoder_forward.4} parent=11 // pred_check_branch
        %151 = sbr.rel (%p149) target = $region20
      $region19: #{node_decoder_forward.4} parent=11 // pred_region
        _
      $region20: #{node_decoder_forward.4} parent=11 // pred_fallthru
        _
    $region12: #{node_decoder_forward.4} parent=5 // pred_fallthru
      _
    %p152 = scmp.lt.s32.totalorder %s11, 2
    // Predicated region
    $region21: #{node_decoder_forward.4} parent=5 // pred_check
      %p153 = pneg %p152
    $region22: #{node_decoder_forward.4} parent=5 // pred_check_branch
      %155 = sbr.rel (%p153) target = $region24
    $region23: #{node_decoder_forward.4} parent=5 // pred_region
      // Predicated region
      $region25: #{node_decoder_forward.4} parent=23 // pred_check
        %p156 = pneg %p31
      $region26: #{node_decoder_forward.4} parent=23 // pred_check_branch
        %158 = sbr.rel (%p156) target = $region28
      $region27: #{node_decoder_forward.4} parent=23 // pred_region
        %s159 = smul.u32 2, %s11
        %p160 = scmp.lt.s32.totalorder %s159, 3
        %s161 = scalar_select %p160, %s159, 3
        %s162 = smul.addr %s161, 8
        %s163 = scalar_lea.vmem %s0, %s162
        %s164 = smul.u32 2, %s11
      $region28: #{node_decoder_forward.4} parent=23 // pred_fallthru
        _
    $region24: #{node_decoder_forward.4} parent=5 // pred_fallthru
      _
    %p165 = scmp.le.s32.totalorder 1, %s11
    %p166 = scmp.lt.s32.totalorder %s11, 3
    %p167 = pnand %p165, %p166
    %p168 = pneg %p167
    // Predicated region
    $region29: #{node_decoder_forward.4} parent=5 // pred_check
      _
    $region30: #{node_decoder_forward.4} parent=5 // pred_check_branch
      %170 = sbr.rel (%p167) target = $region32
    $region31: #{node_decoder_forward.4} parent=5 // pred_region
      %s171 = ssub.s32 %s11, 1
      %s172 = smul.u32 2, %s16
      %p173 = scmp.lt.s32.totalorder %s172, 3
      %s174 = scalar_select %p173, %s172, 3
      %s175 = smul.addr %s174, 8
      %s176 = scalar_lea.vmem %s0, %s175
      %p177 = pneg %p37
      %p178 = pneg %p34
      %p179 = pneg %p58
      %p180 = pneg %p55
      %p181 = pneg %p79
      %p182 = pneg %p76
      %p183 = pneg %p105
      %p184 = pneg %p102
      %p185 = scmp.lt.s32.totalorder %s16, 1
      %s186 = scalar_select %p185, %s16, 1
      %s187 = smul.addr %s186, 8
      %s188 = scalar_lea.vmem %s3, %s187
      %p189 = pneg %p131
      %p190 = pneg %p128
      %p191 = scmp.lt.s32.totalorder %s16, 1
      %s192 = scalar_select %p191, %s16, 1
      %s193 = smul.addr %s192, 8
      %s194 = scalar_lea.vmem %s4, %s193
      %s195 = smul.u32 2, %s16
      %p196 = scmp.lt.s32.totalorder %s195, 3
      %s197 = scalar_select %p196, %s195, 3
      %s198 = smul.addr %s197, 8
      %s199 = scalar_lea.vmem %s0, %s198
      %s200 = smul.u32 2, %s16
      %p201 = scmp.lt.s32.totalorder %s16, 1
      %s202 = scalar_select %p201, %s16, 1
      %s203 = smul.addr %s202, 8
      %s204 = scalar_lea.vmem %s3, %s203
      %p205 = scmp.lt.s32.totalorder %s16, 1
      %s206 = scalar_select %p205, %s16, 1
      %s207 = smul.addr %s206, 8
      %s208 = scalar_lea.vmem %s4, %s207
      %v209 = vld [vmem:[%s199] sm:$0xff]
      %v210 = vld [vmem:[%s199 + $0x8] sm:$0xff]
      %v211 = vld [vmem:[%s1] sm:$0xff]
      %213 = vset.pattern.permute.xlu0 0
      %214 = vperm.xlu0 %213, %v211
      %v215 = vpop.permute.xlu0 %214
      %v217 = vmul.f32 %v209, %v215
      %v218 = vmul.f32 %v210, %v215
      %v219 = vld [vmem:[%s2] sm:$0xff]
      %221 = vset.pattern.permute.xlu0 0
      %222 = vperm.xlu0 %221, %v219
      %v223 = vpop.permute.xlu0 %222
      %v225 = vadd.f32 %v217, %v223
      %v226 = vadd.f32 %v218, %v223
      %vm227 = vcmp.gt.f32.partialorder %v225, 0.0
      %vm228 = vcmp.gt.f32.partialorder %v226, 0.0
      %v229 = vmin.f32 %v225, 0.0
      %v230 = vmin.f32 %v226, 0.0
      %v231 = vmul.f32 %v229, 1.442695
      %v232 = vpow.pop %v231
      %v233 = vmul.f32 %v230, 1.442695
      %v234 = vpow.pop %v233
      %v235 = vsub.f32 %v232, 1.0
      %v236 = vsub.f32 %v234, 1.0
      %v237 = vsel %vm227, %v225, %v235
      %v238 = vsel %vm228, %v226, %v236
      %239 = vmatprep.subr.mxu0 %v238
      %240 = vmatpush1.xpose.msra.mxu0 %v237
      %241 = vmatprep.subr.mxu0 0.0
      %242 = vmatpush1.xpose.msra.mxu0 0.0
      %243 = vmatprep.subr.mxu0 0.0
      %244 = vmatpush1.xpose.msra.mxu0 0.0
      %245 = vmatprep.subr.mxu0 0.0
      %246 = vmatpush1.xpose.msra.mxu0 0.0
      %247 = vmatprep.subr.mxu0 0.0
      %248 = vmatpush1.xpose.msra.mxu0 0.0
      %249 = vmatprep.subr.mxu0 0.0
      %250 = vmatpush1.xpose.msra.mxu0 0.0
      %251 = vmatprep.subr.mxu0 0.0
      %252 = vmatpush1.xpose.msra.mxu0 0.0
      %253 = vmatprep.subr.mxu0 0.0
      %254 = vmatpush1.xpose.msra.mxu0 0.0
      %255 = vmatprep.subr.mxu0 0.0
      %256 = vmatpush1.xpose.msra.mxu0 0.0
      %257 = vmatprep.subr.mxu0 0.0
      %258 = vmatpush1.xpose.msra.mxu0 0.0
      %259 = vmatprep.subr.mxu0 0.0
      %260 = vmatpush1.xpose.msra.mxu0 0.0
      %261 = vmatprep.subr.mxu0 0.0
      %262 = vmatpush1.xpose.msra.mxu0 0.0
      %263 = vmatprep.subr.mxu0 0.0
      %264 = vmatpush1.xpose.msra.mxu0 0.0
      %265 = vmatprep.subr.mxu0 0.0
      %266 = vmatpush1.xpose.msra.mxu0 0.0
      %267 = vmatprep.subr.mxu0 0.0
      %268 = vmatpush1.xpose.msra.mxu0 0.0
      %269 = vmatprep.subr.mxu0 0.0
      %270 = vmatpush1.xpose.msra.mxu0 0.0
      %271 = vmatprep.subr.mxu0 0.0
      %272 = vmatpush1.xpose.msra.mxu0 0.0
      %273 = vmatprep.subr.mxu0 0.0
      %274 = vmatpush1.xpose.msra.mxu0 0.0
      %275 = vmatprep.subr.mxu0 0.0
      %276 = vmatpush1.xpose.msra.mxu0 0.0
      %277 = vmatprep.subr.mxu0 0.0
      %278 = vmatpush1.xpose.msra.mxu0 0.0
      %279 = vmatprep.subr.mxu0 0.0
      %280 = vmatpush1.xpose.msra.mxu0 0.0
      %281 = vmatprep.subr.mxu0 0.0
      %282 = vmatpush1.xpose.msra.mxu0 0.0
      %283 = vmatprep.subr.mxu0 0.0
      %284 = vmatpush1.xpose.msra.mxu0 0.0
      %285 = vmatprep.subr.mxu0 0.0
      %286 = vmatpush1.xpose.msra.mxu0 0.0
      %287 = vmatprep.subr.mxu0 0.0
      %288 = vmatpush1.xpose.msra.mxu0 0.0
      %289 = vmatprep.subr.mxu0 0.0
      %290 = vmatpush1.xpose.msra.mxu0 0.0
      %291 = vmatprep.subr.mxu0 0.0
      %292 = vmatpush1.xpose.msra.mxu0 0.0
      %293 = vmatprep.subr.mxu0 0.0
      %294 = vmatpush1.xpose.msra.mxu0 0.0
      %295 = vmatprep.subr.mxu0 0.0
      %296 = vmatpush1.xpose.msra.mxu0 0.0
      %297 = vmatprep.subr.mxu0 0.0
      %298 = vmatpush1.xpose.msra.mxu0 0.0
      %299 = vmatprep.subr.mxu0 0.0
      %300 = vmatpush1.xpose.msra.mxu0 0.0
      %301 = vmatprep.subr.mxu0 0.0
      %302 = vmatpush1.xpose.msra.mxu0 0.0
      %303 = vmatprep.mubr.f32.mxu0 %v238
      %304 = vmatmul.mubr.f32.gmra.mrb[0].mxu0 %v237
      %v305 = vpop.f32.mrb[0].mxu0
      %v306 = vadd.f32 0.0, %v305
      %v307 = vpop.f32.mrb[0].mxu0
      %308 = vdwg.mxu0
      %vm309 = vcmask 64512
      %310 = vst.msk [vmem:[%s204] sm:$0xff] %vm309, %v306
      %v311 = vadd.f32 %v237, %v238
      %312 = vadd.xlane.f32.xlu0 %v311
      %v313 = vpop.xlane.xlu0 %312
      %vm314 = vcmask 7168
      %315 = vst.msk [vmem:[%s208] sm:$0xff] %vm314, %v313
      %p316 = scmp.lt.s32.totalorder %s16, 1
      %s317 = scalar_select %p316, %s16, 1
      %s318 = smul.addr %s317, 8
      %s319 = scalar_lea.vmem %s3, %s318
      %p320 = scmp.lt.s32.totalorder %s16, 1
      %s321 = scalar_select %p320, %s16, 1
      %s322 = smul.addr %s321, 8
      %s323 = scalar_lea.vmem %s4, %s322
      // Predicated region
      $region33: #{node_decoder_forward.4} parent=31 // pred_check
        %p324 = pneg %p102
      $region34: #{node_decoder_forward.4} parent=31 // pred_check_branch
        %326 = sbr.rel (%p324) target = $region36
      $region35: #{node_decoder_forward.4} parent=31 // pred_region
        _
      $region36: #{node_decoder_forward.4} parent=31 // pred_fallthru
        _
      // Predicated region
      $region37: #{node_decoder_forward.4} parent=31 // pred_check
        %p327 = pneg %p128
      $region38: #{node_decoder_forward.4} parent=31 // pred_check_branch
        %329 = sbr.rel (%p327) target = $region40
      $region39: #{node_decoder_forward.4} parent=31 // pred_region
        _
      $region40: #{node_decoder_forward.4} parent=31 // pred_fallthru
        _
    $region32: #{node_decoder_forward.4} parent=5 // pred_fallthru
      _
    %p330 = scmp.le.s32.totalorder 2, %s11
    // Predicated region
    $region41: #{node_decoder_forward.4} parent=5 // pred_check
      %p331 = pneg %p330
    $region42: #{node_decoder_forward.4} parent=5 // pred_check_branch
      %333 = sbr.rel (%p331) target = $region44
    $region43: #{node_decoder_forward.4} parent=5 // pred_region
      %s334 = ssub.s32 %s11, 2
      // Predicated region
      $region45: #{node_decoder_forward.4} parent=43 // pred_check
        %p335 = pneg %p108
      $region46: #{node_decoder_forward.4} parent=43 // pred_check_branch
        %337 = sbr.rel (%p335) target = $region48
      $region47: #{node_decoder_forward.4} parent=43 // pred_region
        %p338 = scmp.lt.s32.totalorder %s17, 1
        %s339 = scalar_select %p338, %s17, 1
        %s340 = smul.addr %s339, 8
        %s341 = scalar_lea.vmem %s3, %s340
      $region48: #{node_decoder_forward.4} parent=43 // pred_fallthru
        _
      // Predicated region
      $region49: #{node_decoder_forward.4} parent=43 // pred_check
        %p342 = pneg %p134
      $region50: #{node_decoder_forward.4} parent=43 // pred_check_branch
        %344 = sbr.rel (%p342) target = $region52
      $region51: #{node_decoder_forward.4} parent=43 // pred_region
        %p345 = scmp.lt.s32.totalorder %s17, 1
        %s346 = scalar_select %p345, %s17, 1
        %s347 = smul.addr %s346, 8
        %s348 = scalar_lea.vmem %s4, %s347
      $region52: #{node_decoder_forward.4} parent=43 // pred_fallthru
        _
    $region44: #{node_decoder_forward.4} parent=5 // pred_fallthru
      _
  $region6: #{node_decoder_forward.4} parent=0 // loop_footer
    %s15 = sadd.s32 1, %s11
  $region7: #{node_decoder_forward.4} parent=0 // loop_footer_branch
    %10 = sbr.rel target = $region3
  $region8: #{node_decoder_forward.4} parent=0 // loop_exit
    _

// kernel: node_decoder_forward.5
$region0: #{node_decoder_forward.5}
  #allocation0 [shape = 'u32[]', space=smem, size = 0x4, offset = 0x4, fixed_abs, tag = 'smem constant byte address 0x4 - core index']
  #allocation1 [shape = 'u32[144,128]{1,0:T(1,128)}', space=vmem, size = 0x12000, scoped, tag = 'internal scratch']
  %s0 = inlined_call_operand.vmem [shape: f32[8,512], index: 0, kind: input, shape index: {}]
  %s1 = inlined_call_operand.vmem [shape: f32[8,1], index: 1, kind: input, shape index: {}]
  %s2 = inlined_call_operand.vmem [shape: f32[8,1], index: 2, kind: input, shape index: {}]
  %s3 = inlined_call_operand.hbm [shape: f32[32,8], index: 3, kind: input, shape index: {}]
  %s4 = inlined_call_operand.vmem [shape: f32[32,1], index: 4, kind: input, shape index: {}]
  %s5 = inlined_call_operand.vmem [shape: f32[32,1], index: 5, kind: input, shape index: {}]
  %s6 = inlined_call_operand.vmem [shape: f32[32,512], index: 6, kind: output, shape index: {}]
  %s7 = sld [smem:[#allocation0]]
  $region80: #{node_decoder_forward.5} parent=0
    _
  %s9 = ssub.s32 1, %s7
  %s10 = scalar_select 0, %s9, %s7
  $region1: #{node_decoder_forward.5} parent=0
    #allocation2 [shape = 'u8[16384]{0}', space=vmem, size = 0x4000, scoped, tag = 'input window, operand 3, single buffered']
    #allocation3 [shape = 's32[2]{0}', space=sflag, size = 0x8, scoped, tag = 'scoped memory for node_decoder_forward.5']
    #allocation4 [shape = 'u8[65536]{0}', space=vmem, size = 0x10000, scoped, tag = 'output window, operand 0']
    %11 = vsyncpa [#allocation3], 0
    loop: start=0, step=1, limit=4
    $region2: #{node_decoder_forward.5} parent=1 // loop_pre_header
      _
    $region3: #{node_decoder_forward.5} parent=1 // loop_header
      %s13 = sphi 0, %s17
      %p14 = scmp.ge.s32.totalorder %s13, 4
      %s23 = sphi 0, %s25
      %s26 = sphi 0, %s23
      %s27 = sphi 0, %s26
      %s43 = sphi 0, %s27
      %s47 = sphi 0, %s47
      %s49 = sphi 0, %s47
      %s50 = sphi 0, %s49
      %s64 = sphi 0, %s50
      %s68 = sphi 0, %s68
      %s70 = sphi 0, %s68
      %s71 = sphi 0, %s70
      %s85 = sphi 0, %s71
      %s89 = sphi 0, %s89
      %s91 = sphi 0, %s89
      %s92 = sphi 0, %s91
      %s106 = sphi 0, %s92
      %s110 = sphi 0, %s110
      %s112 = sphi 0, %s110
      %s113 = sphi 0, %s112
      %s127 = sphi 0, %s113
      %s131 = sphi 0, %s131
      %s133 = sphi 0, %s131
      %s134 = sphi 0, %s133
      %s148 = sphi 0, %s134
      %s154 = sphi 0, %s156
      %s157 = sphi 0, %s154
      %s158 = sphi 0, %s157
      %s174 = sphi 0, %s158
    $region4: #{node_decoder_forward.5} parent=1 // loop_header_branch
      %16 = sbr.rel (%p14) target = $region8
    $region5: #{node_decoder_forward.5} parent=1 // loop_body
      %s18 = ssub.s32 %s13, 1
      %s19 = ssub.s32 %s13, 2
      %s20 = sadd.s32 %s13, 1
      %s21 = ssub.s32 %s13, %s20
      %p22 = scmp.eq.s32.totalorder %s21, 0
      %s24 = sadd.s32 %s23, 1
      %s25 = scalar_select %p22, %s23, %s24
      %p28 = pneg %p22
      %p29 = scmp.eq.s32.totalorder %s13, 1
      %p30 = por %p28, %p29
      %p31 = scmp.ne.s32.totalorder %s23, %s26
      %p32 = scmp.eq.s32.totalorder %s13, 0
      %p33 = por %p31, %p32
      %p34 = scmp.ne.s32.totalorder %s23, %s26
      %p35 = scmp.eq.s32.totalorder %s18, 1
      %p36 = por %p34, %p35
      %p37 = scmp.ne.s32.totalorder %s26, %s27
      %p38 = scmp.eq.s32.totalorder %s18, 0
      %p39 = por %p37, %p38
      %p40 = scmp.ne.s32.totalorder %s26, %s27
      %p41 = scmp.eq.s32.totalorder %s19, 1
      %p42 = por %p40, %p41
      %p44 = scmp.ne.s32.totalorder %s27, %s43
      %p45 = scmp.eq.s32.totalorder %s19, 0
      %p46 = por %p44, %p45
      %s48 = sadd.s32 %s47, 1
      %p51 = scmp.eq.s32.totalorder %s13, 1
      %p52 = scmp.ne.s32.totalorder %s47, %s49
      %p53 = scmp.eq.s32.totalorder %s13, 0
      %p54 = por %p52, %p53
      %p55 = scmp.ne.s32.totalorder %s47, %s49
      %p56 = scmp.eq.s32.totalorder %s18, 1
      %p57 = por %p55, %p56
      %p58 = scmp.ne.s32.totalorder %s49, %s50
      %p59 = scmp.eq.s32.totalorder %s18, 0
      %p60 = por %p58, %p59
      %p61 = scmp.ne.s32.totalorder %s49, %s50
      %p62 = scmp.eq.s32.totalorder %s19, 1
      %p63 = por %p61, %p62
      %p65 = scmp.ne.s32.totalorder %s50, %s64
      %p66 = scmp.eq.s32.totalorder %s19, 0
      %p67 = por %p65, %p66
      %s69 = sadd.s32 %s68, 1
      %p72 = scmp.eq.s32.totalorder %s13, 1
      %p73 = scmp.ne.s32.totalorder %s68, %s70
      %p74 = scmp.eq.s32.totalorder %s13, 0
      %p75 = por %p73, %p74
      %p76 = scmp.ne.s32.totalorder %s68, %s70
      %p77 = scmp.eq.s32.totalorder %s18, 1
      %p78 = por %p76, %p77
      %p79 = scmp.ne.s32.totalorder %s70, %s71
      %p80 = scmp.eq.s32.totalorder %s18, 0
      %p81 = por %p79, %p80
      %p82 = scmp.ne.s32.totalorder %s70, %s71
      %p83 = scmp.eq.s32.totalorder %s19, 1
      %p84 = por %p82, %p83
      %p86 = scmp.ne.s32.totalorder %s71, %s85
      %p87 = scmp.eq.s32.totalorder %s19, 0
      %p88 = por %p86, %p87
      %s90 = sadd.s32 %s89, 1
      %p93 = scmp.eq.s32.totalorder %s13, 1
      %p94 = scmp.ne.s32.totalorder %s89, %s91
      %p95 = scmp.eq.s32.totalorder %s13, 0
      %p96 = por %p94, %p95
      %p97 = scmp.ne.s32.totalorder %s89, %s91
      %p98 = scmp.eq.s32.totalorder %s18, 1
      %p99 = por %p97, %p98
      %p100 = scmp.ne.s32.totalorder %s91, %s92
      %p101 = scmp.eq.s32.totalorder %s18, 0
      %p102 = por %p100, %p101
      %p103 = scmp.ne.s32.totalorder %s91, %s92
      %p104 = scmp.eq.s32.totalorder %s19, 1
      %p105 = por %p103, %p104
      %p107 = scmp.ne.s32.totalorder %s92, %s106
      %p108 = scmp.eq.s32.totalorder %s19, 0
      %p109 = por %p107, %p108
      %s111 = sadd.s32 %s110, 1
      %p114 = scmp.eq.s32.totalorder %s13, 1
      %p115 = scmp.ne.s32.totalorder %s110, %s112
      %p116 = scmp.eq.s32.totalorder %s13, 0
      %p117 = por %p115, %p116
      %p118 = scmp.ne.s32.totalorder %s110, %s112
      %p119 = scmp.eq.s32.totalorder %s18, 1
      %p120 = por %p118, %p119
      %p121 = scmp.ne.s32.totalorder %s112, %s113
      %p122 = scmp.eq.s32.totalorder %s18, 0
      %p123 = por %p121, %p122
      %p124 = scmp.ne.s32.totalorder %s112, %s113
      %p125 = scmp.eq.s32.totalorder %s19, 1
      %p126 = por %p124, %p125
      %p128 = scmp.ne.s32.totalorder %s113, %s127
      %p129 = scmp.eq.s32.totalorder %s19, 0
      %p130 = por %p128, %p129
      %s132 = sadd.s32 %s131, 1
      %p135 = scmp.eq.s32.totalorder %s13, 1
      %p136 = scmp.ne.s32.totalorder %s131, %s133
      %p137 = scmp.eq.s32.totalorder %s13, 0
      %p138 = por %p136, %p137
      %p139 = scmp.ne.s32.totalorder %s131, %s133
      %p140 = scmp.eq.s32.totalorder %s18, 1
      %p141 = por %p139, %p140
      %p142 = scmp.ne.s32.totalorder %s133, %s134
      %p143 = scmp.eq.s32.totalorder %s18, 0
      %p144 = por %p142, %p143
      %p145 = scmp.ne.s32.totalorder %s133, %s134
      %p146 = scmp.eq.s32.totalorder %s19, 1
      %p147 = por %p145, %p146
      %p149 = scmp.ne.s32.totalorder %s134, %s148
      %p150 = scmp.eq.s32.totalorder %s19, 0
      %p151 = por %p149, %p150
      %s152 = ssub.s32 %s13, %s20
      %p153 = scmp.eq.s32.totalorder %s152, 0
      %s155 = sadd.s32 %s154, 1
      %s156 = scalar_select %p153, %s154, %s155
      %p159 = pneg %p153
      %p160 = scmp.eq.s32.totalorder %s13, 1
      %p161 = por %p159, %p160
      %p162 = scmp.ne.s32.totalorder %s154, %s157
      %p163 = scmp.eq.s32.totalorder %s13, 0
      %p164 = por %p162, %p163
      %p165 = scmp.ne.s32.totalorder %s154, %s157
      %p166 = scmp.eq.s32.totalorder %s18, 1
      %p167 = por %p165, %p166
      %p168 = scmp.ne.s32.totalorder %s157, %s158
      %p169 = scmp.eq.s32.totalorder %s18, 0
      %p170 = por %p168, %p169
      %p171 = scmp.ne.s32.totalorder %s157, %s158
      %p172 = scmp.eq.s32.totalorder %s19, 1
      %p173 = por %p171, %p172
      %p175 = scmp.ne.s32.totalorder %s158, %s174
      %p176 = scmp.eq.s32.totalorder %s19, 0
      %p177 = por %p175, %p176
      %p178 = scmp.le.s32.totalorder 1, %s13
      %p179 = scmp.lt.s32.totalorder %s13, 3
      %p180 = pnand %p178, %p179
      %p181 = pneg %p180
      // Predicated region
      $region9: #{node_decoder_forward.5} parent=5 // pred_check
        _
      $region10: #{node_decoder_forward.5} parent=5 // pred_check_branch
        %183 = sbr.rel (%p180) target = $region12
      $region11: #{node_decoder_forward.5} parent=5 // pred_region
        %s184 = ssub.s32 %s13, 1
        // Predicated region
        $region13: #{node_decoder_forward.5} parent=11 // pred_check
          %p185 = pneg %p60
        $region14: #{node_decoder_forward.5} parent=11 // pred_check_branch
          %187 = sbr.rel (%p185) target = $region16
        $region15: #{node_decoder_forward.5} parent=11 // pred_region
          _
        $region16: #{node_decoder_forward.5} parent=11 // pred_fallthru
          _
        // Predicated region
        $region17: #{node_decoder_forward.5} parent=11 // pred_check
          %p188 = pneg %p81
        $region18: #{node_decoder_forward.5} parent=11 // pred_check_branch
          %190 = sbr.rel (%p188) target = $region20
        $region19: #{node_decoder_forward.5} parent=11 // pred_region
          _
        $region20: #{node_decoder_forward.5} parent=11 // pred_fallthru
          _
        // Predicated region
        $region21: #{node_decoder_forward.5} parent=11 // pred_check
          %p191 = pneg %p102
        $region22: #{node_decoder_forward.5} parent=11 // pred_check_branch
          %193 = sbr.rel (%p191) target = $region24
        $region23: #{node_decoder_forward.5} parent=11 // pred_region
          %s195 = ssub.s32 512, 512
          %196 = vsyncadd [#allocation3], %s195
          %s197 = sshll.u32 [#allocation2], 4
          %s198 = int_to_ptr.vmem [resolvable:$true] %s197
          %203 = dma.hbm_to_vmem [thread:$0]  %s3, 512, %s198, [#allocation3], 128, 128, 8
        $region24: #{node_decoder_forward.5} parent=11 // pred_fallthru
          _
        // Predicated region
        $region25: #{node_decoder_forward.5} parent=11 // pred_check
          %p204 = pneg %p123
        $region26: #{node_decoder_forward.5} parent=11 // pred_check_branch
          %206 = sbr.rel (%p204) target = $region28
        $region27: #{node_decoder_forward.5} parent=11 // pred_region
          _
        $region28: #{node_decoder_forward.5} parent=11 // pred_fallthru
          _
        // Predicated region
        $region29: #{node_decoder_forward.5} parent=11 // pred_check
          %p207 = pneg %p144
        $region30: #{node_decoder_forward.5} parent=11 // pred_check_branch
          %209 = sbr.rel (%p207) target = $region32
        $region31: #{node_decoder_forward.5} parent=11 // pred_region
          _
        $region32: #{node_decoder_forward.5} parent=11 // pred_fallthru
          _
      $region12: #{node_decoder_forward.5} parent=5 // pred_fallthru
        _
      %p210 = scmp.lt.s32.totalorder %s13, 2
      // Predicated region
      $region33: #{node_decoder_forward.5} parent=5 // pred_check
        %p211 = pneg %p210
      $region34: #{node_decoder_forward.5} parent=5 // pred_check_branch
        %213 = sbr.rel (%p211) target = $region36
      $region35: #{node_decoder_forward.5} parent=5 // pred_region
        // Predicated region
        $region37: #{node_decoder_forward.5} parent=35 // pred_check
          %p214 = pneg %p33
        $region38: #{node_decoder_forward.5} parent=35 // pred_check_branch
          %216 = sbr.rel (%p214) target = $region40
        $region39: #{node_decoder_forward.5} parent=35 // pred_region
          %s217 = smul.u32 2, %s13
          %p218 = scmp.lt.s32.totalorder %s217, 3
          %s219 = scalar_select %p218, %s217, 3
          %s220 = smul.addr %s219, 8
          %s221 = scalar_lea.vmem %s0, %s220
          %s222 = smul.u32 2, %s13
        $region40: #{node_decoder_forward.5} parent=35 // pred_fallthru
          _
      $region36: #{node_decoder_forward.5} parent=5 // pred_fallthru
        _
      %p223 = scmp.le.s32.totalorder 1, %s13
      %p224 = scmp.lt.s32.totalorder %s13, 3
      %p225 = pnand %p223, %p224
      %p226 = pneg %p225
      // Predicated region
      $region41: #{node_decoder_forward.5} parent=5 // pred_check
        _
      $region42: #{node_decoder_forward.5} parent=5 // pred_check_branch
        %228 = sbr.rel (%p225) target = $region44
      $region43: #{node_decoder_forward.5} parent=5 // pred_region
        %s229 = ssub.s32 %s13, 1
        // Predicated region
        $region45: #{node_decoder_forward.5} parent=43 // pred_check
          %p230 = pneg %p102
        $region46: #{node_decoder_forward.5} parent=43 // pred_check_branch
          %232 = sbr.rel (%p230) target = $region48
        $region47: #{node_decoder_forward.5} parent=43 // pred_region
          %233 = dma.done [#allocation3], 512
        $region48: #{node_decoder_forward.5} parent=43 // pred_fallthru
          _
        %s234 = smul.u32 2, %s18
        %p235 = scmp.lt.s32.totalorder %s234, 3
        %s236 = scalar_select %p235, %s234, 3
        %s237 = smul.addr %s236, 8
        %s238 = scalar_lea.vmem %s0, %s237
        %p239 = pneg %p39
        %p240 = pneg %p36
        %p241 = pneg %p60
        %p242 = pneg %p57
        %p243 = pneg %p81
        %p244 = pneg %p78
        %p245 = pneg %p102
        %p246 = pneg %p99
        %p247 = pneg %p123
        %p248 = pneg %p120
        %p249 = pneg %p144
        %p250 = pneg %p141
        %p251 = pneg %p170
        %p252 = pneg %p167
        %s253 = sand.u32 %s157, 1
        %s254 = sand.u32 %s157, 1
        %s255 = smul.addr %s254, 64
        %s256 = scalar_lea.vmem [#allocation4], %s255
        %s257 = smul.u32 2, %s18
        %p258 = scmp.lt.s32.totalorder %s257, 3
        %s259 = scalar_select %p258, %s257, 3
        %s260 = smul.addr %s259, 8
        %s261 = scalar_lea.vmem %s0, %s260
        %s262 = smul.u32 2, %s18
        %s263 = smul.u32 2, %s18
        %v264 = vld [vmem:[%s261] sm:$0xff]
        %v265 = vld [vmem:[%s261 + $0x8] sm:$0xff]
        %v266 = vld [vmem:[%s1] sm:$0xff]
        %268 = vset.pattern.permute.xlu0 0
        %269 = vperm.xlu0 %268, %v266
        %v270 = vpop.permute.xlu0 %269
        %v272 = vmul.f32 %v264, %v270
        %v273 = vmul.f32 %v265, %v270
        %v274 = vld [vmem:[%s2] sm:$0xff]
        %276 = vset.pattern.permute.xlu0 0
        %277 = vperm.xlu0 %276, %v274
        %v278 = vpop.permute.xlu0 %277
        %v280 = vadd.f32 %v272, %v278
        %v281 = vadd.f32 %v273, %v278
        %vm282 = vcmp.gt.f32.partialorder %v280, 0.0
        %vm283 = vcmp.gt.f32.partialorder %v281, 0.0
        %v284 = vmin.f32 %v280, 0.0
        %v285 = vmin.f32 %v281, 0.0
        %v286 = vmul.f32 %v284, 1.442695
        %v287 = vpow.pop %v286
        %v288 = vmul.f32 %v285, 1.442695
        %v289 = vpow.pop %v288
        %v290 = vsub.f32 %v287, 1.0
        %v291 = vsub.f32 %v289, 1.0
        %v292 = vsel %vm282, %v280, %v290
        %v293 = vsel %vm283, %v281, %v291
        %v294 = vld [vmem:[#allocation2] sm:$0xff]
        %v295 = vld [vmem:[#allocation2 + $0x8] sm:$0xff]
        %v296 = vld [vmem:[#allocation2 + $0x10] sm:$0xff]
        %v297 = vld [vmem:[#allocation2 + $0x18] sm:$0xff]
        %vm298 = vcmask 64512
        %v300 = vsel %vm298, %v294, 0
        %v303 = vsel %vm298, %v295, 0
        %v306 = vsel %vm298, %v296, 0
        %v309 = vsel %vm298, %v297, 0
        %311 = vmatprep.subr.mxu0 %v293
        %312 = vmatpush1.msra.mxu0 %v292
        %313 = vmatprep.subr.mxu0 0.0
        %314 = vmatpush1.msra.mxu0 0.0
        %315 = vmatprep.subr.mxu0 0.0
        %316 = vmatpush1.msra.mxu0 0.0
        %317 = vmatprep.subr.mxu0 0.0
        %318 = vmatpush1.msra.mxu0 0.0
        %319 = vmatprep.subr.mxu0 0.0
        %320 = vmatpush1.msra.mxu0 0.0
        %321 = vmatprep.subr.mxu0 0.0
        %322 = vmatpush1.msra.mxu0 0.0
        %323 = vmatprep.subr.mxu0 0.0
        %324 = vmatpush1.msra.mxu0 0.0
        %325 = vmatprep.subr.mxu0 0.0
        %326 = vmatpush1.msra.mxu0 0.0
        %327 = vmatprep.subr.mxu0 0.0
        %328 = vmatpush1.msra.mxu0 0.0
        %329 = vmatprep.subr.mxu0 0.0
        %330 = vmatpush1.msra.mxu0 0.0
        %331 = vmatprep.subr.mxu0 0.0
        %332 = vmatpush1.msra.mxu0 0.0
        %333 = vmatprep.subr.mxu0 0.0
        %334 = vmatpush1.msra.mxu0 0.0
        %335 = vmatprep.subr.mxu0 0.0
        %336 = vmatpush1.msra.mxu0 0.0
        %337 = vmatprep.subr.mxu0 0.0
        %338 = vmatpush1.msra.mxu0 0.0
        %339 = vmatprep.subr.mxu0 0.0
        %340 = vmatpush1.msra.mxu0 0.0
        %341 = vmatprep.subr.mxu0 0.0
        %342 = vmatpush1.msra.mxu0 0.0
        %343 = vmatprep.subr.mxu0 0.0
        %344 = vmatpush1.msra.mxu0 0.0
        %345 = vmatprep.subr.mxu0 0.0
        %346 = vmatpush1.msra.mxu0 0.0
        %347 = vmatprep.subr.mxu0 0.0
        %348 = vmatpush1.msra.mxu0 0.0
        %349 = vmatprep.subr.mxu0 0.0
        %350 = vmatpush1.msra.mxu0 0.0
        %351 = vmatprep.subr.mxu0 0.0
        %352 = vmatpush1.msra.mxu0 0.0
        %353 = vmatprep.subr.mxu0 0.0
        %354 = vmatpush1.msra.mxu0 0.0
        %355 = vmatprep.subr.mxu0 0.0
        %356 = vmatpush1.msra.mxu0 0.0
        %357 = vmatprep.subr.mxu0 0.0
        %358 = vmatpush1.msra.mxu0 0.0
        %359 = vmatprep.subr.mxu0 0.0
        %360 = vmatpush1.msra.mxu0 0.0
        %361 = vmatprep.subr.mxu0 0.0
        %362 = vmatpush1.msra.mxu0 0.0
        %363 = vmatprep.subr.mxu0 0.0
        %364 = vmatpush1.msra.mxu0 0.0
        %365 = vmatprep.subr.mxu0 0.0
        %366 = vmatpush1.msra.mxu0 0.0
        %367 = vmatprep.subr.mxu0 0.0
        %368 = vmatpush1.msra.mxu0 0.0
        %369 = vmatprep.subr.mxu0 0.0
        %370 = vmatpush1.msra.mxu0 0.0
        %371 = vmatprep.subr.mxu0 0.0
        %372 = vmatpush1.msra.mxu0 0.0
        %373 = vmatprep.subr.mxu0 0.0
        %374 = vmatpush1.msra.mxu0 0.0
        %375 = vmatprep.mubr.f32.mxu0 0.0
        %376 = vmatmul.mubr.f32.gmra.mrb[0].mxu0 %v300
        %v377 = vpop.f32.mrb[0].mxu0
        %v378 = vadd.f32 0.0, %v377
        %v379 = vpop.f32.mrb[0].mxu0
        %v380 = vadd.f32 0.0, %v379
        %381 = vmatprep.mubr.f32.mxu0 0.0
        %382 = vmatmul.mubr.f32.gmra.mrb[0].mxu0 %v303
        %v383 = vpop.f32.mrb[0].mxu0
        %v384 = vadd.f32 0.0, %v383
        %v385 = vpop.f32.mrb[0].mxu0
        %v386 = vadd.f32 0.0, %v385
        %387 = vmatprep.mubr.f32.mxu0 0.0
        %388 = vmatmul.mubr.f32.gmra.mrb[0].mxu0 %v306
        %v389 = vpop.f32.mrb[0].mxu0
        %v390 = vadd.f32 0.0, %v389
        %v391 = vpop.f32.mrb[0].mxu0
        %v392 = vadd.f32 0.0, %v391
        %393 = vmatprep.mubr.f32.mxu0 0.0
        %394 = vmatmul.mubr.f32.gmra.mrb[0].mxu0 %v309
        %v395 = vpop.f32.mrb[0].mxu0
        %v396 = vadd.f32 0.0, %v395
        %v397 = vpop.f32.mrb[0].mxu0
        %v398 = vadd.f32 0.0, %v397
        %399 = vdwg.mxu0
        %v400 = vld [vmem:[%s4] sm:$0xff]
        %v401 = vld [vmem:[%s4 + $0x8] sm:$0xff]
        %v402 = vld [vmem:[%s4 + $0x10] sm:$0xff]
        %v403 = vld [vmem:[%s4 + $0x18] sm:$0xff]
        %405 = vset.pattern.permute.xlu0 0
        %406 = vperm.xlu0 %405, %v400
        %v407 = vpop.permute.xlu0 %406
        %410 = vset.pattern.permute.xlu0 0
        %411 = vperm.xlu0 %410, %v401
        %v412 = vpop.permute.xlu0 %411
        %415 = vset.pattern.permute.xlu0 0
        %416 = vperm.xlu0 %415, %v402
        %v417 = vpop.permute.xlu0 %416
        %420 = vset.pattern.permute.xlu0 0
        %421 = vperm.xlu0 %420, %v403
        %v422 = vpop.permute.xlu0 %421
        %v424 = vmul.f32 %v378, %v407
        %v425 = vmul.f32 %v380, %v407
        %v426 = vmul.f32 %v384, %v412
        %v427 = vmul.f32 %v386, %v412
        %v428 = vmul.f32 %v390, %v417
        %v429 = vmul.f32 %v392, %v417
        %v430 = vmul.f32 %v396, %v422
        %v431 = vmul.f32 %v398, %v422
        %v432 = vld [vmem:[%s5] sm:$0xff]
        %v433 = vld [vmem:[%s5 + $0x8] sm:$0xff]
        %v434 = vld [vmem:[%s5 + $0x10] sm:$0xff]
        %v435 = vld [vmem:[%s5 + $0x18] sm:$0xff]
        %437 = vset.pattern.permute.xlu0 0
        %438 = vperm.xlu0 %437, %v432
        %v439 = vpop.permute.xlu0 %438
        %442 = vset.pattern.permute.xlu0 0
        %443 = vperm.xlu0 %442, %v433
        %v444 = vpop.permute.xlu0 %443
        %447 = vset.pattern.permute.xlu0 0
        %448 = vperm.xlu0 %447, %v434
        %v449 = vpop.permute.xlu0 %448
        %452 = vset.pattern.permute.xlu0 0
        %453 = vperm.xlu0 %452, %v435
        %v454 = vpop.permute.xlu0 %453
        %v456 = vadd.f32 %v424, %v439
        %v457 = vadd.f32 %v425, %v439
        %v458 = vadd.f32 %v426, %v444
        %v459 = vadd.f32 %v427, %v444
        %v460 = vadd.f32 %v428, %v449
        %v461 = vadd.f32 %v429, %v449
        %v462 = vadd.f32 %v430, %v454
        %v463 = vadd.f32 %v431, %v454
        %vm464 = vcmp.gt.f32.partialorder %v456, 0.0
        %vm465 = vcmp.gt.f32.partialorder %v457, 0.0
        %vm466 = vcmp.gt.f32.partialorder %v458, 0.0
        %vm467 = vcmp.gt.f32.partialorder %v459, 0.0
        %vm468 = vcmp.gt.f32.partialorder %v460, 0.0
        %vm469 = vcmp.gt.f32.partialorder %v461, 0.0
        %vm470 = vcmp.gt.f32.partialorder %v462, 0.0
        %vm471 = vcmp.gt.f32.partialorder %v463, 0.0
        %v472 = vmin.f32 %v456, 0.0
        %v473 = vmin.f32 %v457, 0.0
        %v474 = vmin.f32 %v458, 0.0
        %v475 = vmin.f32 %v459, 0.0
        %v476 = vmin.f32 %v460, 0.0
        %v477 = vmin.f32 %v461, 0.0
        %v478 = vmin.f32 %v462, 0.0
        %v479 = vmin.f32 %v463, 0.0
        %v480 = vmul.f32 %v472, 1.442695
        %v481 = vpow.pop %v480
        %v482 = vmul.f32 %v473, 1.442695
        %v483 = vpow.pop %v482
        %v484 = vmul.f32 %v474, 1.442695
        %v485 = vpow.pop %v484
        %v486 = vmul.f32 %v475, 1.442695
        %v487 = vpow.pop %v486
        %v488 = vmul.f32 %v476, 1.442695
        %v489 = vpow.pop %v488
        %v490 = vmul.f32 %v477, 1.442695
        %v491 = vpow.pop %v490
        %v492 = vmul.f32 %v478, 1.442695
        %v493 = vpow.pop %v492
        %v494 = vmul.f32 %v479, 1.442695
        %v495 = vpow.pop %v494
        %v496 = vsub.f32 %v481, 1.0
        %v497 = vsub.f32 %v483, 1.0
        %v498 = vsub.f32 %v485, 1.0
        %v499 = vsub.f32 %v487, 1.0
        %v500 = vsub.f32 %v489, 1.0
        %v501 = vsub.f32 %v491, 1.0
        %v502 = vsub.f32 %v493, 1.0
        %v503 = vsub.f32 %v495, 1.0
        %v504 = vsel %vm464, %v456, %v496
        %v505 = vsel %vm465, %v457, %v497
        %v506 = vsel %vm466, %v458, %v498
        %v507 = vsel %vm467, %v459, %v499
        %v508 = vsel %vm468, %v460, %v500
        %v509 = vsel %vm469, %v461, %v501
        %v510 = vsel %vm470, %v462, %v502
        %v511 = vsel %vm471, %v463, %v503
        %512 = vst [vmem:[%s256] sm:$0xff] %v504
        %513 = vst [vmem:[%s256 + $0x8] sm:$0xff] %v505
        %514 = vst [vmem:[%s256 + $0x10] sm:$0xff] %v506
        %515 = vst [vmem:[%s256 + $0x18] sm:$0xff] %v507
        %516 = vst [vmem:[%s256 + $0x20] sm:$0xff] %v508
        %517 = vst [vmem:[%s256 + $0x28] sm:$0xff] %v509
        %518 = vst [vmem:[%s256 + $0x30] sm:$0xff] %v510
        %519 = vst [vmem:[%s256 + $0x38] sm:$0xff] %v511
        %s520 = sand.u32 %s157, 1
        %s521 = sand.u32 %s157, 1
        %s522 = smul.addr %s521, 64
        %s523 = scalar_lea.vmem [#allocation4], %s522
        // Predicated region
        $region49: #{node_decoder_forward.5} parent=43 // pred_check
          %p524 = pneg %p167
        $region50: #{node_decoder_forward.5} parent=43 // pred_check_branch
          %526 = sbr.rel (%p524) target = $region52
        $region51: #{node_decoder_forward.5} parent=43 // pred_region
          %s527 = smul.u32 2, %s18
          %s528 = smul.addr %s527, 8
          %s529 = scalar_lea.vmem %s6, %s528
          // Predicated region
          $region53: #{node_decoder_forward.5} parent=51 // pred_check
            _
          $region54: #{node_decoder_forward.5} parent=51 // pred_check_branch
            %531 = sbr.rel (0) target = $region56
          $region55: #{node_decoder_forward.5} parent=51 // pred_region
            // Predicated region
            $region57: #{node_decoder_forward.5} parent=55 // pred_check
              _
            $region58: #{node_decoder_forward.5} parent=55 // pred_check_branch
              %533 = sbr.rel (0) target = $region60
            $region59: #{node_decoder_forward.5} parent=55 // pred_region
              loop: start=0, step=1, limit=1
              $region61: #{node_decoder_forward.5} parent=59 // loop_pre_header
                _
              $region62: #{node_decoder_forward.5} parent=59 // loop_header
                %s535 = sphi 0, %s539
                %p536 = scmp.ge.s32.totalorder %s535, 1
                %s540 = sphi %s523, %s523
                %s541 = sphi %s529, %s529
              $region63: #{node_decoder_forward.5} parent=59 // loop_header_branch
                %538 = sbr.rel (%p536) target = $region67
              $region64: #{node_decoder_forward.5} parent=59 // loop_body
                %v542 = vld [vmem:[%s540] sm:$0xff]
                %543 = vst [vmem:[%s541] sm:$0xff] %v542
                %v544 = vld [vmem:[%s540 + $0x8] sm:$0xff]
                %545 = vst [vmem:[%s541 + $0x8] sm:$0xff] %v544
                %v546 = vld [vmem:[%s540 + $0x10] sm:$0xff]
                %547 = vst [vmem:[%s541 + $0x20] sm:$0xff] %v546
                %v548 = vld [vmem:[%s540 + $0x18] sm:$0xff]
                %549 = vst [vmem:[%s541 + $0x28] sm:$0xff] %v548
                %v550 = vld [vmem:[%s540 + $0x20] sm:$0xff]
                %551 = vst [vmem:[%s541 + $0x40] sm:$0xff] %v550
                %v552 = vld [vmem:[%s540 + $0x28] sm:$0xff]
                %553 = vst [vmem:[%s541 + $0x48] sm:$0xff] %v552
                %v554 = vld [vmem:[%s540 + $0x30] sm:$0xff]
                %555 = vst [vmem:[%s541 + $0x60] sm:$0xff] %v554
                %v556 = vld [vmem:[%s540 + $0x38] sm:$0xff]
                %557 = vst [vmem:[%s541 + $0x68] sm:$0xff] %v556
              $region65: #{node_decoder_forward.5} parent=59 // loop_footer
                %s539 = sadd.s32 1, %s535
              $region66: #{node_decoder_forward.5} parent=59 // loop_footer_branch
                %534 = sbr.rel target = $region62
              $region67: #{node_decoder_forward.5} parent=59 // loop_exit
                _
            $region60: #{node_decoder_forward.5} parent=55 // pred_fallthru
              _
            // Predicated region
            $region68: #{node_decoder_forward.5} parent=55 // pred_check
              _
            $region69: #{node_decoder_forward.5} parent=55 // pred_check_branch
              %559 = sbr.rel target = $region71
            $region70: #{node_decoder_forward.5} parent=55 // pred_region
              _
            $region71: #{node_decoder_forward.5} parent=55 // pred_fallthru
              _
          $region56: #{node_decoder_forward.5} parent=51 // pred_fallthru
            _
          %560 = vnop
        $region52: #{node_decoder_forward.5} parent=43 // pred_fallthru
          _
      $region44: #{node_decoder_forward.5} parent=5 // pred_fallthru
        _
      %p561 = scmp.le.s32.totalorder 2, %s13
      // Predicated region
      $region72: #{node_decoder_forward.5} parent=5 // pred_check
        %p562 = pneg %p561
      $region73: #{node_decoder_forward.5} parent=5 // pred_check_branch
        %564 = sbr.rel (%p562) target = $region75
      $region74: #{node_decoder_forward.5} parent=5 // pred_region
        %s565 = ssub.s32 %s13, 2
        // Predicated region
        $region76: #{node_decoder_forward.5} parent=74 // pred_check
          %p566 = pneg %p173
        $region77: #{node_decoder_forward.5} parent=74 // pred_check_branch
          %568 = sbr.rel (%p566) target = $region79
        $region78: #{node_decoder_forward.5} parent=74 // pred_region
          %s569 = sand.u32 %s158, 1
          %s570 = sand.u32 %s158, 1
          %s571 = smul.addr %s570, 64
          %s572 = scalar_lea.vmem [#allocation4], %s571
        $region79: #{node_decoder_forward.5} parent=74 // pred_fallthru
          _
      $region75: #{node_decoder_forward.5} parent=5 // pred_fallthru
        _
    $region6: #{node_decoder_forward.5} parent=1 // loop_footer
      %s17 = sadd.s32 1, %s13
    $region7: #{node_decoder_forward.5} parent=1 // loop_footer_branch
      %12 = sbr.rel target = $region3
    $region8: #{node_decoder_forward.5} parent=1 // loop_exit
      _
    %573 = vsyncpa [#allocation3], 1
    %s574 = scalar_lea.sflag [#allocation3], 1
    %575 = vsyncpa %s574, 1

// kernel: node_decoder_forward.3
$region0: #{node_decoder_forward.3}
  #allocation0 [shape = 'u32[]', space=smem, size = 0x4, offset = 0x4, fixed_abs, tag = 'smem constant byte address 0x4 - core index']
  #allocation1 [shape = 'u32[144,128]{1,0:T(1,128)}', space=vmem, size = 0x12000, scoped, tag = 'internal scratch']
  #allocation2 [shape = 'f32[4,512]{1,0:T(4,128)}', space=vmem, size = 0x2000, scoped, tag = 'scratch operand']
  #allocation3 [shape = 'f32[128,256]{1,0:T(8,128)}', space=vmem, size = 0x20000, scoped, tag = 'scratch operand']
  %s0 = inlined_call_operand.hbm [shape: f32[8,128], index: 0, kind: input, shape index: {}]
  %s1 = inlined_call_operand.vmem [shape: f32[4,512], index: 1, kind: input, shape index: {}, may-alias: {1,2,3}]
  %s2 = inlined_call_operand.vmem [shape: f32[4,512], index: 2, kind: input, shape index: {}, may-alias: {1,2,3}]
  %s3 = inlined_call_operand.vmem [shape: f32[4,512], index: 3, kind: input, shape index: {}, may-alias: {1,2,3}]
  %s4 = inlined_call_operand.vmem [shape: f32[1,512], index: 4, kind: input, shape index: {}]
  %s5 = inlined_call_operand.vmem [shape: f32[8,512], index: 5, kind: output, shape index: {0}]
  %s6 = inlined_call_operand.vmem [shape: f32[2,8,1], index: 6, kind: output, shape index: {1}]
  %s7 = inlined_call_operand.vmem [shape: f32[2,8,1], index: 7, kind: output, shape index: {2}]
  %8 = xla_tuple %s5, %s6, %s7
  %s9 = sld [smem:[#allocation0]]
  $region73: #{node_decoder_forward.3} parent=0
    _
  %s11 = ssub.s32 1, %s9
  %s12 = scalar_select 0, %s11, %s9
  $region1: #{node_decoder_forward.3} parent=0
    #allocation4 [shape = 'u8[4096]{0}', space=vmem, size = 0x1000, scoped, tag = 'input window, operand 0, single buffered']
    #allocation5 [shape = 's32[2]{0}', space=sflag, size = 0x8, scoped, tag = 'scoped memory for node_decoder_forward.3']
    %13 = vsyncpa [#allocation5], 0
    loop: start=0, step=1, limit=4
    $region2: #{node_decoder_forward.3} parent=1 // loop_pre_header
      _
    $region3: #{node_decoder_forward.3} parent=1 // loop_header
      %s15 = sphi 0, %s19
      %p16 = scmp.ge.s32.totalorder %s15, 4
      %s23 = sphi 0, %s23
      %s25 = sphi 0, %s23
      %s26 = sphi 0, %s25
      %s40 = sphi 0, %s26
      %s54 = sphi 0, %s56
      %s57 = sphi 0, %s54
      %s58 = sphi 0, %s57
      %s74 = sphi 0, %s58
      %s80 = sphi 0, %s82
      %s83 = sphi 0, %s80
      %s84 = sphi 0, %s83
      %s100 = sphi 0, %s84
      %s114 = sphi 0, %s116
      %s117 = sphi 0, %s114
      %s118 = sphi 0, %s117
      %s134 = sphi 0, %s118
      %s140 = sphi 0, %s142
      %s143 = sphi 0, %s140
      %s144 = sphi 0, %s143
      %s160 = sphi 0, %s144
      %s166 = sphi 0, %s168
      %s169 = sphi 0, %s166
      %s170 = sphi 0, %s169
      %s186 = sphi 0, %s170
      %s192 = sphi 0, %s194
      %s195 = sphi 0, %s192
      %s196 = sphi 0, %s195
      %s212 = sphi 0, %s196
      %s218 = sphi 0, %s220
      %s221 = sphi 0, %s218
      %s222 = sphi 0, %s221
      %s238 = sphi 0, %s222
    $region4: #{node_decoder_forward.3} parent=1 // loop_header_branch
      %18 = sbr.rel (%p16) target = $region8
    $region5: #{node_decoder_forward.3} parent=1 // loop_body
      %s20 = ssub.s32 %s15, 1
      %s21 = ssub.s32 %s15, 2
      %s22 = sadd.s32 %s15, 1
      %s24 = sadd.s32 %s23, 1
      %p27 = scmp.eq.s32.totalorder %s15, 1
      %p28 = scmp.ne.s32.totalorder %s23, %s25
      %p29 = scmp.eq.s32.totalorder %s15, 0
      %p30 = por %p28, %p29
      %p31 = scmp.ne.s32.totalorder %s23, %s25
      %p32 = scmp.eq.s32.totalorder %s20, 1
      %p33 = por %p31, %p32
      %p34 = scmp.ne.s32.totalorder %s25, %s26
      %p35 = scmp.eq.s32.totalorder %s20, 0
      %p36 = por %p34, %p35
      %p37 = scmp.ne.s32.totalorder %s25, %s26
      %p38 = scmp.eq.s32.totalorder %s21, 1
      %p39 = por %p37, %p38
      %p41 = scmp.ne.s32.totalorder %s26, %s40
      %p42 = scmp.eq.s32.totalorder %s21, 0
      %p43 = por %p41, %p42
      %s44 = smul.u32 %s15, 2
      %s45 = ssub.s32 %s44, 1
      %p46 = scmp.gt.s32.totalorder %s45, 0
      %s47 = scalar_select %p46, %s45, 0
      %s48 = smul.u32 %s22, 2
      %s49 = ssub.s32 %s48, 1
      %p50 = scmp.gt.s32.totalorder %s49, 0
      %s51 = scalar_select %p50, %s49, 0
      %s52 = ssub.s32 %s47, %s51
      %p53 = scmp.eq.s32.totalorder %s52, 0
      %s55 = sadd.s32 %s54, 1
      %s56 = scalar_select %p53, %s54, %s55
      %p59 = pneg %p53
      %p60 = scmp.eq.s32.totalorder %s15, 1
      %p61 = por %p59, %p60
      %p62 = scmp.ne.s32.totalorder %s54, %s57
      %p63 = scmp.eq.s32.totalorder %s15, 0
      %p64 = por %p62, %p63
      %p65 = scmp.ne.s32.totalorder %s54, %s57
      %p66 = scmp.eq.s32.totalorder %s20, 1
      %p67 = por %p65, %p66
      %p68 = scmp.ne.s32.totalorder %s57, %s58
      %p69 = scmp.eq.s32.totalorder %s20, 0
      %p70 = por %p68, %p69
      %p71 = scmp.ne.s32.totalorder %s57, %s58
      %p72 = scmp.eq.s32.totalorder %s21, 1
      %p73 = por %p71, %p72
      %p75 = scmp.ne.s32.totalorder %s58, %s74
      %p76 = scmp.eq.s32.totalorder %s21, 0
      %p77 = por %p75, %p76
      %s78 = ssub.s32 %s15, %s22
      %p79 = scmp.eq.s32.totalorder %s78, 0
      %s81 = sadd.s32 %s80, 1
      %s82 = scalar_select %p79, %s80, %s81
      %p85 = pneg %p79
      %p86 = scmp.eq.s32.totalorder %s15, 1
      %p87 = por %p85, %p86
      %p88 = scmp.ne.s32.totalorder %s80, %s83
      %p89 = scmp.eq.s32.totalorder %s15, 0
      %p90 = por %p88, %p89
      %p91 = scmp.ne.s32.totalorder %s80, %s83
      %p92 = scmp.eq.s32.totalorder %s20, 1
      %p93 = por %p91, %p92
      %p94 = scmp.ne.s32.totalorder %s83, %s84
      %p95 = scmp.eq.s32.totalorder %s20, 0
      %p96 = por %p94, %p95
      %p97 = scmp.ne.s32.totalorder %s83, %s84
      %p98 = scmp.eq.s32.totalorder %s21, 1
      %p99 = por %p97, %p98
      %p101 = scmp.ne.s32.totalorder %s84, %s100
      %p102 = scmp.eq.s32.totalorder %s21, 0
      %p103 = por %p101, %p102
      %s104 = sadd.s32 %s15, 1
      %s105 = smul.u32 %s104, 2
      %p106 = scmp.lt.s32.totalorder %s105, 3
      %s107 = scalar_select %p106, %s105, 3
      %s108 = sadd.s32 %s22, 1
      %s109 = smul.u32 %s108, 2
      %p110 = scmp.lt.s32.totalorder %s109, 3
      %s111 = scalar_select %p110, %s109, 3
      %s112 = ssub.s32 %s107, %s111
      %p113 = scmp.eq.s32.totalorder %s112, 0
      %s115 = sadd.s32 %s114, 1
      %s116 = scalar_select %p113, %s114, %s115
      %p119 = pneg %p113
      %p120 = scmp.eq.s32.totalorder %s15, 1
      %p121 = por %p119, %p120
      %p122 = scmp.ne.s32.totalorder %s114, %s117
      %p123 = scmp.eq.s32.totalorder %s15, 0
      %p124 = por %p122, %p123
      %p125 = scmp.ne.s32.totalorder %s114, %s117
      %p126 = scmp.eq.s32.totalorder %s20, 1
      %p127 = por %p125, %p126
      %p128 = scmp.ne.s32.totalorder %s117, %s118
      %p129 = scmp.eq.s32.totalorder %s20, 0
      %p130 = por %p128, %p129
      %p131 = scmp.ne.s32.totalorder %s117, %s118
      %p132 = scmp.eq.s32.totalorder %s21, 1
      %p133 = por %p131, %p132
      %p135 = scmp.ne.s32.totalorder %s118, %s134
      %p136 = scmp.eq.s32.totalorder %s21, 0
      %p137 = por %p135, %p136
      %s138 = ssub.s32 %s15, %s22
      %p139 = scmp.eq.s32.totalorder %s138, 0
      %s141 = sadd.s32 %s140, 1
      %s142 = scalar_select %p139, %s140, %s141
      %p145 = pneg %p139
      %p146 = scmp.eq.s32.totalorder %s15, 1
      %p147 = por %p145, %p146
      %p148 = scmp.ne.s32.totalorder %s140, %s143
      %p149 = scmp.eq.s32.totalorder %s15, 0
      %p150 = por %p148, %p149
      %p151 = scmp.ne.s32.totalorder %s140, %s143
      %p152 = scmp.eq.s32.totalorder %s20, 1
      %p153 = por %p151, %p152
      %p154 = scmp.ne.s32.totalorder %s143, %s144
      %p155 = scmp.eq.s32.totalorder %s20, 0
      %p156 = por %p154, %p155
      %p157 = scmp.ne.s32.totalorder %s143, %s144
      %p158 = scmp.eq.s32.totalorder %s21, 1
      %p159 = por %p157, %p158
      %p161 = scmp.ne.s32.totalorder %s144, %s160
      %p162 = scmp.eq.s32.totalorder %s21, 0
      %p163 = por %p161, %p162
      %s164 = ssub.s32 %s15, %s22
      %p165 = scmp.eq.s32.totalorder %s164, 0
      %s167 = sadd.s32 %s166, 1
      %s168 = scalar_select %p165, %s166, %s167
      %p171 = pneg %p165
      %p172 = scmp.eq.s32.totalorder %s15, 1
      %p173 = por %p171, %p172
      %p174 = scmp.ne.s32.totalorder %s166, %s169
      %p175 = scmp.eq.s32.totalorder %s15, 0
      %p176 = por %p174, %p175
      %p177 = scmp.ne.s32.totalorder %s166, %s169
      %p178 = scmp.eq.s32.totalorder %s20, 1
      %p179 = por %p177, %p178
      %p180 = scmp.ne.s32.totalorder %s169, %s170
      %p181 = scmp.eq.s32.totalorder %s20, 0
      %p182 = por %p180, %p181
      %p183 = scmp.ne.s32.totalorder %s169, %s170
      %p184 = scmp.eq.s32.totalorder %s21, 1
      %p185 = por %p183, %p184
      %p187 = scmp.ne.s32.totalorder %s170, %s186
      %p188 = scmp.eq.s32.totalorder %s21, 0
      %p189 = por %p187, %p188
      %s190 = ssub.s32 %s15, %s22
      %p191 = scmp.eq.s32.totalorder %s190, 0
      %s193 = sadd.s32 %s192, 1
      %s194 = scalar_select %p191, %s192, %s193
      %p197 = pneg %p191
      %p198 = scmp.eq.s32.totalorder %s15, 1
      %p199 = por %p197, %p198
      %p200 = scmp.ne.s32.totalorder %s192, %s195
      %p201 = scmp.eq.s32.totalorder %s15, 0
      %p202 = por %p200, %p201
      %p203 = scmp.ne.s32.totalorder %s192, %s195
      %p204 = scmp.eq.s32.totalorder %s20, 1
      %p205 = por %p203, %p204
      %p206 = scmp.ne.s32.totalorder %s195, %s196
      %p207 = scmp.eq.s32.totalorder %s20, 0
      %p208 = por %p206, %p207
      %p209 = scmp.ne.s32.totalorder %s195, %s196
      %p210 = scmp.eq.s32.totalorder %s21, 1
      %p211 = por %p209, %p210
      %p213 = scmp.ne.s32.totalorder %s196, %s212
      %p214 = scmp.eq.s32.totalorder %s21, 0
      %p215 = por %p213, %p214
      %s216 = ssub.s32 %s15, %s22
      %p217 = scmp.eq.s32.totalorder %s216, 0
      %s219 = sadd.s32 %s218, 1
      %s220 = scalar_select %p217, %s218, %s219
      %p223 = pneg %p217
      %p224 = scmp.eq.s32.totalorder %s15, 1
      %p225 = por %p223, %p224
      %p226 = scmp.ne.s32.totalorder %s218, %s221
      %p227 = scmp.eq.s32.totalorder %s15, 0
      %p228 = por %p226, %p227
      %p229 = scmp.ne.s32.totalorder %s218, %s221
      %p230 = scmp.eq.s32.totalorder %s20, 1
      %p231 = por %p229, %p230
      %p232 = scmp.ne.s32.totalorder %s221, %s222
      %p233 = scmp.eq.s32.totalorder %s20, 0
      %p234 = por %p232, %p233
      %p235 = scmp.ne.s32.totalorder %s221, %s222
      %p236 = scmp.eq.s32.totalorder %s21, 1
      %p237 = por %p235, %p236
      %p239 = scmp.ne.s32.totalorder %s222, %s238
      %p240 = scmp.eq.s32.totalorder %s21, 0
      %p241 = por %p239, %p240
      %p242 = scmp.le.s32.totalorder 1, %s15
      %p243 = scmp.lt.s32.totalorder %s15, 3
      %p244 = pnand %p242, %p243
      %p245 = pneg %p244
      // Predicated region
      $region9: #{node_decoder_forward.3} parent=5 // pred_check
        _
      $region10: #{node_decoder_forward.3} parent=5 // pred_check_branch
        %247 = sbr.rel (%p244) target = $region12
      $region11: #{node_decoder_forward.3} parent=5 // pred_region
        %s248 = ssub.s32 %s15, 1
        // Predicated region
        $region13: #{node_decoder_forward.3} parent=11 // pred_check
          %p249 = pneg %p36
        $region14: #{node_decoder_forward.3} parent=11 // pred_check_branch
          %251 = sbr.rel (%p249) target = $region16
        $region15: #{node_decoder_forward.3} parent=11 // pred_region
          %s253 = ssub.s32 128, 128
          %254 = vsyncadd [#allocation5], %s253
          %s256 = sshll.u32 [#allocation4], 4
          %s257 = int_to_ptr.vmem [resolvable:$true] %s256
          %259 = dma.hbm_to_vmem [thread:$0]  %s0, 128, %s257, [#allocation5]
        $region16: #{node_decoder_forward.3} parent=11 // pred_fallthru
          _
      $region12: #{node_decoder_forward.3} parent=5 // pred_fallthru
        _
      %p260 = scmp.lt.s32.totalorder %s15, 2
      // Predicated region
      $region17: #{node_decoder_forward.3} parent=5 // pred_check
        %p261 = pneg %p260
      $region18: #{node_decoder_forward.3} parent=5 // pred_check_branch
        %263 = sbr.rel (%p261) target = $region20
      $region19: #{node_decoder_forward.3} parent=5 // pred_region
        // Predicated region
        $region21: #{node_decoder_forward.3} parent=19 // pred_check
          %p264 = pneg %p64
        $region22: #{node_decoder_forward.3} parent=19 // pred_check_branch
          %266 = sbr.rel (%p264) target = $region24
        $region23: #{node_decoder_forward.3} parent=19 // pred_region
          %s267 = smul.u32 %s15, 2
          %s268 = ssub.s32 %s267, 1
          %p269 = scmp.gt.s32.totalorder %s268, 0
          %s270 = scalar_select %p269, %s268, 0
          %p271 = scmp.lt.s32.totalorder %s270, 3
          %s272 = scalar_select %p271, %s270, 3
          %s273 = smul.addr %s272, 4
          %s274 = scalar_lea.vmem %s1, %s273
          %s275 = smul.u32 %s15, 2
          %s276 = ssub.s32 %s275, 1
          %p277 = scmp.gt.s32.totalorder %s276, 0
          %s278 = scalar_select %p277, %s276, 0
        $region24: #{node_decoder_forward.3} parent=19 // pred_fallthru
          _
        // Predicated region
        $region25: #{node_decoder_forward.3} parent=19 // pred_check
          %p279 = pneg %p90
        $region26: #{node_decoder_forward.3} parent=19 // pred_check_branch
          %281 = sbr.rel (%p279) target = $region28
        $region27: #{node_decoder_forward.3} parent=19 // pred_region
          %s282 = smul.u32 2, %s15
          %p283 = scmp.lt.s32.totalorder %s282, 3
          %s284 = scalar_select %p283, %s282, 3
          %s285 = smul.addr %s284, 4
          %s286 = scalar_lea.vmem %s2, %s285
          %s287 = smul.u32 2, %s15
        $region28: #{node_decoder_forward.3} parent=19 // pred_fallthru
          _
        // Predicated region
        $region29: #{node_decoder_forward.3} parent=19 // pred_check
          %p288 = pneg %p124
        $region30: #{node_decoder_forward.3} parent=19 // pred_check_branch
          %290 = sbr.rel (%p288) target = $region32
        $region31: #{node_decoder_forward.3} parent=19 // pred_region
          %s291 = sadd.s32 %s15, 1
          %s292 = smul.u32 %s291, 2
          %p293 = scmp.lt.s32.totalorder %s292, 3
          %s294 = scalar_select %p293, %s292, 3
          %p295 = scmp.lt.s32.totalorder %s294, 3
          %s296 = scalar_select %p295, %s294, 3
          %s297 = smul.addr %s296, 4
          %s298 = scalar_lea.vmem %s3, %s297
          %s299 = sadd.s32 %s15, 1
          %s300 = smul.u32 %s299, 2
          %p301 = scmp.lt.s32.totalorder %s300, 3
          %s302 = scalar_select %p301, %s300, 3
        $region32: #{node_decoder_forward.3} parent=19 // pred_fallthru
          _
        // Predicated region
        $region33: #{node_decoder_forward.3} parent=19 // pred_check
          %p303 = pneg %p150
        $region34: #{node_decoder_forward.3} parent=19 // pred_check_branch
          %305 = sbr.rel (%p303) target = $region36
        $region35: #{node_decoder_forward.3} parent=19 // pred_region
          %s306 = smul.u32 2, %s15
          %p307 = scmp.lt.s32.totalorder %s306, 3
          %s308 = scalar_select %p307, %s306, 3
          %s309 = scalar_lea.vmem %s4, %s308
          %s310 = smul.u32 2, %s15
        $region36: #{node_decoder_forward.3} parent=19 // pred_fallthru
          _
      $region20: #{node_decoder_forward.3} parent=5 // pred_fallthru
        _
      %p311 = scmp.le.s32.totalorder 1, %s15
      %p312 = scmp.lt.s32.totalorder %s15, 3
      %p313 = pnand %p311, %p312
      %p314 = pneg %p313
      // Predicated region
      $region37: #{node_decoder_forward.3} parent=5 // pred_check
        _
      $region38: #{node_decoder_forward.3} parent=5 // pred_check_branch
        %316 = sbr.rel (%p313) target = $region40
      $region39: #{node_decoder_forward.3} parent=5 // pred_region
        %s317 = ssub.s32 %s15, 1
        // Predicated region
        $region41: #{node_decoder_forward.3} parent=39 // pred_check
          %p318 = pneg %p36
        $region42: #{node_decoder_forward.3} parent=39 // pred_check_branch
          %320 = sbr.rel (%p318) target = $region44
        $region43: #{node_decoder_forward.3} parent=39 // pred_region
          %321 = dma.done [#allocation5], 128
        $region44: #{node_decoder_forward.3} parent=39 // pred_fallthru
          _
        %p322 = pneg %p36
        %p323 = pneg %p33
        %s324 = smul.u32 %s20, 2
        %s325 = ssub.s32 %s324, 1
        %p326 = scmp.gt.s32.totalorder %s325, 0
        %s327 = scalar_select %p326, %s325, 0
        %p328 = scmp.lt.s32.totalorder %s327, 3
        %s329 = scalar_select %p328, %s327, 3
        %s330 = smul.addr %s329, 4
        %s331 = scalar_lea.vmem %s1, %s330
        %p332 = pneg %p70
        %p333 = pneg %p67
        %s334 = smul.u32 2, %s20
        %p335 = scmp.lt.s32.totalorder %s334, 3
        %s336 = scalar_select %p335, %s334, 3
        %s337 = smul.addr %s336, 4
        %s338 = scalar_lea.vmem %s2, %s337
        %p339 = pneg %p96
        %p340 = pneg %p93
        %s341 = sadd.s32 %s20, 1
        %s342 = smul.u32 %s341, 2
        %p343 = scmp.lt.s32.totalorder %s342, 3
        %s344 = scalar_select %p343, %s342, 3
        %p345 = scmp.lt.s32.totalorder %s344, 3
        %s346 = scalar_select %p345, %s344, 3
        %s347 = smul.addr %s346, 4
        %s348 = scalar_lea.vmem %s3, %s347
        %p349 = pneg %p130
        %p350 = pneg %p127
        %s351 = smul.u32 2, %s20
        %p352 = scmp.lt.s32.totalorder %s351, 3
        %s353 = scalar_select %p352, %s351, 3
        %s354 = scalar_lea.vmem %s4, %s353
        %p355 = pneg %p156
        %p356 = pneg %p153
        %p357 = pneg %p182
        %p358 = pneg %p179
        %s359 = smul.u32 2, %s20
        %p360 = scmp.lt.s32.totalorder %s359, 3
        %s361 = scalar_select %p360, %s359, 3
        %s362 = smul.addr %s361, 8
        %s363 = scalar_lea.vmem %s5, %s362
        %p364 = pneg %p208
        %p365 = pneg %p205
        %p366 = scmp.lt.s32.totalorder %s20, 1
        %s367 = scalar_select %p366, %s20, 1
        %s368 = smul.addr %s367, 8
        %s369 = scalar_lea.vmem %s6, %s368
        %p370 = pneg %p234
        %p371 = pneg %p231
        %p372 = scmp.lt.s32.totalorder %s20, 1
        %s373 = scalar_select %p372, %s20, 1
        %s374 = smul.addr %s373, 8
        %s375 = scalar_lea.vmem %s7, %s374
        %s376 = smul.u32 %s20, 2
        %s377 = ssub.s32 %s376, 1
        %p378 = scmp.gt.s32.totalorder %s377, 0
        %s379 = scalar_select %p378, %s377, 0
        %p380 = scmp.lt.s32.totalorder %s379, 3
        %s381 = scalar_select %p380, %s379, 3
        %s382 = smul.addr %s381, 4
        %s383 = scalar_lea.vmem %s1, %s382
        %s384 = smul.u32 %s20, 2
        %s385 = ssub.s32 %s384, 1
        %p386 = scmp.gt.s32.totalorder %s385, 0
        %s387 = scalar_select %p386, %s385, 0
        %s388 = smul.u32 2, %s20
        %p389 = scmp.lt.s32.totalorder %s388, 3
        %s390 = scalar_select %p389, %s388, 3
        %s391 = smul.addr %s390, 4
        %s392 = scalar_lea.vmem %s2, %s391
        %s393 = smul.u32 2, %s20
        %s394 = sadd.s32 %s20, 1
        %s395 = smul.u32 %s394, 2
        %p396 = scmp.lt.s32.totalorder %s395, 3
        %s397 = scalar_select %p396, %s395, 3
        %p398 = scmp.lt.s32.totalorder %s397, 3
        %s399 = scalar_select %p398, %s397, 3
        %s400 = smul.addr %s399, 4
        %s401 = scalar_lea.vmem %s3, %s400
        %s402 = sadd.s32 %s20, 1
        %s403 = smul.u32 %s402, 2
        %p404 = scmp.lt.s32.totalorder %s403, 3
        %s405 = scalar_select %p404, %s403, 3
        %s406 = smul.u32 2, %s20
        %p407 = scmp.lt.s32.totalorder %s406, 3
        %s408 = scalar_select %p407, %s406, 3
        %s409 = scalar_lea.vmem %s4, %s408
        %s410 = smul.u32 2, %s20
        %s411 = smul.u32 2, %s20
        %p412 = scmp.lt.s32.totalorder %s411, 3
        %s413 = scalar_select %p412, %s411, 3
        %s414 = smul.addr %s413, 8
        %s415 = scalar_lea.vmem %s5, %s414
        %s416 = smul.u32 2, %s20
        %p417 = scmp.lt.s32.totalorder %s20, 1
        %s418 = scalar_select %p417, %s20, 1
        %s419 = smul.addr %s418, 8
        %s420 = scalar_lea.vmem %s6, %s419
        %p421 = scmp.lt.s32.totalorder %s20, 1
        %s422 = scalar_select %p421, %s20, 1
        %s423 = smul.addr %s422, 8
        %s424 = scalar_lea.vmem %s7, %s423
        %v425 = vld [vmem:[%s383] sm:$0xf]
        %426 = vst [vmem:[#allocation2] sm:$0xf] %v425
        %v427 = vld [vmem:[%s392] sm:$0xff]
        %428 = vst [vmem:[#allocation2 + $0x4] sm:$0xff] %v427
        %v429 = vld [vmem:[%s401] sm:$0xf]
        %430 = vst [vmem:[#allocation2 + $0xc] sm:$0xf] %v429
        %v431 = vld [vmem:[#allocation2] sm:$0xff]
        %v432 = vld [vmem:[#allocation2 + $0x8] sm:$0xf]
        %v435 = vcombine.high %v431, %v431
        %436 = vrot.lane.b32.xlu0 %v431, 43
        %v437 = vpop.permute.xlu0 %436
        %438 = vrot.lane.b32.xlu0 %v435, 43
        %v439 = vpop.permute.xlu0 %438
        %440 = vrot.lane.b32.xlu0 %v432, 43
        %v441 = vpop.permute.xlu0 %440
        %vm442 = vcmask 351232
        %v443 = vsel %vm442, %v437, %v439
        %v444 = vsel %vm442, %v439, %v441
        %447 = vst [vmem:[#allocation3] sm:$0xf] %v443
        %448 = vst [vmem:[#allocation3 + $0x8] sm:$0xf] %v444
        %v449 = vld [vmem:[#allocation2] sm:$0xff]
        %v450 = vld [vmem:[#allocation2 + $0x8] sm:$0xf]
        %v453 = vcombine.low %v449, %v449
        %v454 = vcombine.low %v450, %v450
        %455 = vrot.lane.b32.xlu0 %v453, 42
        %v456 = vpop.permute.xlu0 %455
        %457 = vrot.lane.b32.xlu0 %v449, 42
        %v458 = vpop.permute.xlu0 %457
        %459 = vrot.lane.b32.xlu0 %v454, 42
        %v460 = vpop.permute.xlu0 %459
        %vm461 = vcmask 343040
        %v462 = vsel %vm461, %v456, %v458
        %v463 = vsel %vm461, %v458, %v460
        %466 = vst [vmem:[#allocation3] sm:$0xf0] %v462
        %467 = vst [vmem:[#allocation3 + $0x8] sm:$0xf0] %v463
        %v468 = vld [vmem:[#allocation2] sm:$0xff]
        %v469 = vld [vmem:[#allocation2 + $0x8] sm:$0xf]
        %v472 = vcombine.high %v468, %v468
        %473 = vrot.lane.b32.xlu0 %v468, 41
        %v474 = vpop.permute.xlu0 %473
        %475 = vrot.lane.b32.xlu0 %v472, 41
        %v476 = vpop.permute.xlu0 %475
        %477 = vrot.lane.b32.xlu0 %v469, 41
        %v478 = vpop.permute.xlu0 %477
        %vm479 = vcmask 334848
        %v480 = vsel %vm479, %v474, %v476
        %v481 = vsel %vm479, %v476, %v478
        %484 = vst [vmem:[#allocation3 + $0x10] sm:$0xf] %v480
        %485 = vst [vmem:[#allocation3 + $0x18] sm:$0xf] %v481
        %v486 = vld [vmem:[#allocation2] sm:$0xff]
        %v487 = vld [vmem:[#allocation2 + $0x8] sm:$0xf]
        %v490 = vcombine.low %v486, %v486
        %v491 = vcombine.low %v487, %v487
        %492 = vrot.lane.b32.xlu0 %v490, 37
        %v493 = vpop.permute.xlu0 %492
        %494 = vrot.lane.b32.xlu0 %v486, 37
        %v495 = vpop.permute.xlu0 %494
        %496 = vrot.lane.b32.xlu0 %v491, 37
        %v497 = vpop.permute.xlu0 %496
        %vm498 = vcmask 302080
        %v499 = vsel %vm498, %v493, %v495
        %v500 = vsel %vm498, %v495, %v497
        %503 = vst [vmem:[#allocation3 + $0x10] sm:$0xf0] %v499
        %504 = vst [vmem:[#allocation3 + $0x18] sm:$0xf0] %v500
        %v505 = vld [vmem:[#allocation2] sm:$0xff]
        %v506 = vld [vmem:[#allocation2 + $0x8] sm:$0xf]
        %v509 = vcombine.high %v505, %v505
        %510 = vrot.lane.b32.xlu0 %v505, 36
        %v511 = vpop.permute.xlu0 %510
        %512 = vrot.lane.b32.xlu0 %v509, 36
        %v513 = vpop.permute.xlu0 %512
        %514 = vrot.lane.b32.xlu0 %v506, 36
        %v515 = vpop.permute.xlu0 %514
        %vm516 = vcmask 293888
        %v517 = vsel %vm516, %v511, %v513
        %v518 = vsel %vm516, %v513, %v515
        %521 = vst [vmem:[#allocation3 + $0x20] sm:$0xf] %v517
        %522 = vst [vmem:[#allocation3 + $0x28] sm:$0xf] %v518
        %v523 = vld [vmem:[#allocation2] sm:$0xff]
        %v524 = vld [vmem:[#allocation2 + $0x8] sm:$0xf]
        %v527 = vcombine.low %v523, %v523
        %v528 = vcombine.low %v524, %v524
        %529 = vrot.lane.b32.xlu0 %v527, 35
        %v530 = vpop.permute.xlu0 %529
        %531 = vrot.lane.b32.xlu0 %v523, 35
        %v532 = vpop.permute.xlu0 %531
        %533 = vrot.lane.b32.xlu0 %v528, 35
        %v534 = vpop.permute.xlu0 %533
        %vm535 = vcmask 285696
        %v536 = vsel %vm535, %v530, %v532
        %v537 = vsel %vm535, %v532, %v534
        %540 = vst [vmem:[#allocation3 + $0x20] sm:$0xf0] %v536
        %541 = vst [vmem:[#allocation3 + $0x28] sm:$0xf0] %v537
        %v542 = vld [vmem:[#allocation2] sm:$0xff]
        %v543 = vld [vmem:[#allocation2 + $0x8] sm:$0xf]
        %v546 = vcombine.high %v542, %v542
        %547 = vrot.lane.b32.xlu0 %v542, 31
        %v548 = vpop.permute.xlu0 %547
        %549 = vrot.lane.b32.xlu0 %v546, 31
        %v550 = vpop.permute.xlu0 %549
        %551 = vrot.lane.b32.xlu0 %v543, 31
        %v552 = vpop.permute.xlu0 %551
        %vm553 = vcmask 252928
        %v554 = vsel %vm553, %v548, %v550
        %v555 = vsel %vm553, %v550, %v552
        %558 = vst [vmem:[#allocation3 + $0x30] sm:$0xf] %v554
        %559 = vst [vmem:[#allocation3 + $0x38] sm:$0xf] %v555
        %v560 = vld [vmem:[#allocation2] sm:$0xff]
        %v561 = vld [vmem:[#allocation2 + $0x8] sm:$0xf]
        %v564 = vcombine.low %v560, %v560
        %v565 = vcombine.low %v561, %v561
        %566 = vrot.lane.b32.xlu0 %v564, 30
        %v567 = vpop.permute.xlu0 %566
        %568 = vrot.lane.b32.xlu0 %v560, 30
        %v569 = vpop.permute.xlu0 %568
        %570 = vrot.lane.b32.xlu0 %v565, 30
        %v571 = vpop.permute.xlu0 %570
        %vm572 = vcmask 244736
        %v573 = vsel %vm572, %v567, %v569
        %v574 = vsel %vm572, %v569, %v571
        %577 = vst [vmem:[#allocation3 + $0x30] sm:$0xf0] %v573
        %578 = vst [vmem:[#allocation3 + $0x38] sm:$0xf0] %v574
        %v579 = vld [vmem:[#allocation2] sm:$0xff]
        %v580 = vld [vmem:[#allocation2 + $0x8] sm:$0xf]
        %v583 = vcombine.high %v579, %v579
        %584 = vrot.lane.b32.xlu0 %v579, 29
        %v585 = vpop.permute.xlu0 %584
        %586 = vrot.lane.b32.xlu0 %v583, 29
        %v587 = vpop.permute.xlu0 %586
        %588 = vrot.lane.b32.xlu0 %v580, 29
        %v589 = vpop.permute.xlu0 %588
        %vm590 = vcmask 236544
        %v591 = vsel %vm590, %v585, %v587
        %v592 = vsel %vm590, %v587, %v589
        %595 = vst [vmem:[#allocation3 + $0x40] sm:$0xf] %v591
        %596 = vst [vmem:[#allocation3 + $0x48] sm:$0xf] %v592
        %v597 = vld [vmem:[#allocation2] sm:$0xff]
        %v598 = vld [vmem:[#allocation2 + $0x8] sm:$0xf]
        %v601 = vcombine.low %v597, %v597
        %v602 = vcombine.low %v598, %v598
        %603 = vrot.lane.b32.xlu0 %v601, 7
        %v604 = vpop.permute.xlu0 %603
        %605 = vrot.lane.b32.xlu0 %v597, 7
        %v606 = vpop.permute.xlu0 %605
        %607 = vrot.lane.b32.xlu0 %v602, 7
        %v608 = vpop.permute.xlu0 %607
        %vm609 = vcmask 56320
        %v610 = vsel %vm609, %v604, %v606
        %v611 = vsel %vm609, %v606, %v608
        %614 = vst [vmem:[#allocation3 + $0x40] sm:$0xf0] %v610
        %615 = vst [vmem:[#allocation3 + $0x48] sm:$0xf0] %v611
        %v616 = vld [vmem:[#allocation2] sm:$0xff]
        %v617 = vld [vmem:[#allocation2 + $0x8] sm:$0xf]
        %v620 = vcombine.high %v616, %v616
        %621 = vrot.lane.b32.xlu0 %v616, 6
        %v622 = vpop.permute.xlu0 %621
        %623 = vrot.lane.b32.xlu0 %v620, 6
        %v624 = vpop.permute.xlu0 %623
        %625 = vrot.lane.b32.xlu0 %v617, 6
        %v626 = vpop.permute.xlu0 %625
        %vm627 = vcmask 48128
        %v628 = vsel %vm627, %v622, %v624
        %v629 = vsel %vm627, %v624, %v626
        %632 = vst [vmem:[#allocation3 + $0x50] sm:$0xf] %v628
        %633 = vst [vmem:[#allocation3 + $0x58] sm:$0xf] %v629
        %v634 = vld [vmem:[#allocation2] sm:$0xff]
        %v635 = vld [vmem:[#allocation2 + $0x8] sm:$0xf]
        %v638 = vcombine.low %v634, %v634
        %v639 = vcombine.low %v635, %v635
        %640 = vrot.lane.b32.xlu0 %v638, 5
        %v641 = vpop.permute.xlu0 %640
        %642 = vrot.lane.b32.xlu0 %v634, 5
        %v643 = vpop.permute.xlu0 %642
        %644 = vrot.lane.b32.xlu0 %v639, 5
        %v645 = vpop.permute.xlu0 %644
        %vm646 = vcmask 39936
        %v647 = vsel %vm646, %v641, %v643
        %v648 = vsel %vm646, %v643, %v645
        %651 = vst [vmem:[#allocation3 + $0x50] sm:$0xf0] %v647
        %652 = vst [vmem:[#allocation3 + $0x58] sm:$0xf0] %v648
        %v653 = vld [vmem:[#allocation2] sm:$0xff]
        %v654 = vld [vmem:[#allocation2 + $0x8] sm:$0xf]
        %v657 = vcombine.high %v653, %v653
        %658 = vrot.lane.b32.xlu0 %v653, 1
        %v659 = vpop.permute.xlu0 %658
        %660 = vrot.lane.b32.xlu0 %v657, 1
        %v661 = vpop.permute.xlu0 %660
        %662 = vrot.lane.b32.xlu0 %v654, 1
        %v663 = vpop.permute.xlu0 %662
        %vm664 = vcmask 7168
        %v665 = vsel %vm664, %v659, %v661
        %v666 = vsel %vm664, %v661, %v663
        %669 = vst [vmem:[#allocation3 + $0x60] sm:$0xf] %v665
        %670 = vst [vmem:[#allocation3 + $0x68] sm:$0xf] %v666
        %v671 = vld [vmem:[#allocation2 + $0x4] sm:$0xff]
        %v673 = vcombine.low %v671, %v671
        %675 = vst [vmem:[#allocation3 + $0x60] sm:$0xf0] %v673
        %676 = vst [vmem:[#allocation3 + $0x68] sm:$0xf0] %v671
        %v677 = vld [vmem:[#allocation2 + $0x4] sm:$0xff]
        %v678 = vld [vmem:[#allocation2 + $0xc] sm:$0xf]
        %v681 = vcombine.high %v677, %v677
        %682 = vrot.lane.b32.xlu0 %v677, 127
        %v683 = vpop.permute.xlu0 %682
        %684 = vrot.lane.b32.xlu0 %v681, 127
        %v685 = vpop.permute.xlu0 %684
        %686 = vrot.lane.b32.xlu0 %v678, 127
        %v687 = vpop.permute.xlu0 %686
        %vm688 = vcmask 1039360
        %v689 = vsel %vm688, %v683, %v685
        %v690 = vsel %vm688, %v685, %v687
        %693 = vst [vmem:[#allocation3 + $0x70] sm:$0xf] %v689
        %694 = vst [vmem:[#allocation3 + $0x78] sm:$0xf] %v690
        %v695 = vld [vmem:[#allocation2 + $0x4] sm:$0xff]
        %v696 = vld [vmem:[#allocation2 + $0xc] sm:$0xf]
        %v699 = vcombine.low %v695, %v695
        %v700 = vcombine.low %v696, %v696
        %701 = vrot.lane.b32.xlu0 %v699, 123
        %v702 = vpop.permute.xlu0 %701
        %703 = vrot.lane.b32.xlu0 %v695, 123
        %v704 = vpop.permute.xlu0 %703
        %705 = vrot.lane.b32.xlu0 %v700, 123
        %v706 = vpop.permute.xlu0 %705
        %vm707 = vcmask 1006592
        %v708 = vsel %vm707, %v702, %v704
        %v709 = vsel %vm707, %v704, %v706
        %712 = vst [vmem:[#allocation3 + $0x70] sm:$0xf0] %v708
        %713 = vst [vmem:[#allocation3 + $0x78] sm:$0xf0] %v709
        %v714 = vld [vmem:[#allocation2 + $0x4] sm:$0xff]
        %v715 = vld [vmem:[#allocation2 + $0xc] sm:$0xf]
        %v718 = vcombine.high %v714, %v714
        %719 = vrot.lane.b32.xlu0 %v714, 122
        %v720 = vpop.permute.xlu0 %719
        %721 = vrot.lane.b32.xlu0 %v718, 122
        %v722 = vpop.permute.xlu0 %721
        %723 = vrot.lane.b32.xlu0 %v715, 122
        %v724 = vpop.permute.xlu0 %723
        %vm725 = vcmask 998400
        %v726 = vsel %vm725, %v720, %v722
        %v727 = vsel %vm725, %v722, %v724
        %730 = vst [vmem:[#allocation3 + $0x80] sm:$0xf] %v726
        %731 = vst [vmem:[#allocation3 + $0x88] sm:$0xf] %v727
        %v732 = vld [vmem:[#allocation2 + $0x4] sm:$0xff]
        %v733 = vld [vmem:[#allocation2 + $0xc] sm:$0xf]
        %v736 = vcombine.low %v732, %v732
        %v737 = vcombine.low %v733, %v733
        %738 = vrot.lane.b32.xlu0 %v736, 121
        %v739 = vpop.permute.xlu0 %738
        %740 = vrot.lane.b32.xlu0 %v732, 121
        %v741 = vpop.permute.xlu0 %740
        %742 = vrot.lane.b32.xlu0 %v737, 121
        %v743 = vpop.permute.xlu0 %742
        %vm744 = vcmask 990208
        %v745 = vsel %vm744, %v739, %v741
        %v746 = vsel %vm744, %v741, %v743
        %749 = vst [vmem:[#allocation3 + $0x80] sm:$0xf0] %v745
        %750 = vst [vmem:[#allocation3 + $0x88] sm:$0xf0] %v746
        %v751 = vld [vmem:[#allocation2 + $0x4] sm:$0xff]
        %v752 = vld [vmem:[#allocation2 + $0xc] sm:$0xf]
        %v755 = vcombine.high %v751, %v751
        %756 = vrot.lane.b32.xlu0 %v751, 99
        %v757 = vpop.permute.xlu0 %756
        %758 = vrot.lane.b32.xlu0 %v755, 99
        %v759 = vpop.permute.xlu0 %758
        %760 = vrot.lane.b32.xlu0 %v752, 99
        %v761 = vpop.permute.xlu0 %760
        %vm762 = vcmask 809984
        %v763 = vsel %vm762, %v757, %v759
        %v764 = vsel %vm762, %v759, %v761
        %767 = vst [vmem:[#allocation3 + $0x90] sm:$0xf] %v763
        %768 = vst [vmem:[#allocation3 + $0x98] sm:$0xf] %v764
        %v769 = vld [vmem:[#allocation2 + $0x4] sm:$0xff]
        %v770 = vld [vmem:[#allocation2 + $0xc] sm:$0xf]
        %v773 = vcombine.low %v769, %v769
        %v774 = vcombine.low %v770, %v770
        %775 = vrot.lane.b32.xlu0 %v773, 98
        %v776 = vpop.permute.xlu0 %775
        %777 = vrot.lane.b32.xlu0 %v769, 98
        %v778 = vpop.permute.xlu0 %777
        %779 = vrot.lane.b32.xlu0 %v774, 98
        %v780 = vpop.permute.xlu0 %779
        %vm781 = vcmask 801792
        %v782 = vsel %vm781, %v776, %v778
        %v783 = vsel %vm781, %v778, %v780
        %786 = vst [vmem:[#allocation3 + $0x90] sm:$0xf0] %v782
        %787 = vst [vmem:[#allocation3 + $0x98] sm:$0xf0] %v783
        %v788 = vld [vmem:[#allocation2 + $0x4] sm:$0xff]
        %v789 = vld [vmem:[#allocation2 + $0xc] sm:$0xf]
        %v792 = vcombine.high %v788, %v788
        %793 = vrot.lane.b32.xlu0 %v788, 97
        %v794 = vpop.permute.xlu0 %793
        %795 = vrot.lane.b32.xlu0 %v792, 97
        %v796 = vpop.permute.xlu0 %795
        %797 = vrot.lane.b32.xlu0 %v789, 97
        %v798 = vpop.permute.xlu0 %797
        %vm799 = vcmask 793600
        %v800 = vsel %vm799, %v794, %v796
        %v801 = vsel %vm799, %v796, %v798
        %804 = vst [vmem:[#allocation3 + $0xa0] sm:$0xf] %v800
        %805 = vst [vmem:[#allocation3 + $0xa8] sm:$0xf] %v801
        %v806 = vld [vmem:[#allocation2 + $0x4] sm:$0xff]
        %v807 = vld [vmem:[#allocation2 + $0xc] sm:$0xf]
        %v810 = vcombine.low %v806, %v806
        %v811 = vcombine.low %v807, %v807
        %812 = vrot.lane.b32.xlu0 %v810, 93
        %v813 = vpop.permute.xlu0 %812
        %814 = vrot.lane.b32.xlu0 %v806, 93
        %v815 = vpop.permute.xlu0 %814
        %816 = vrot.lane.b32.xlu0 %v811, 93
        %v817 = vpop.permute.xlu0 %816
        %vm818 = vcmask 760832
        %v819 = vsel %vm818, %v813, %v815
        %v820 = vsel %vm818, %v815, %v817
        %823 = vst [vmem:[#allocation3 + $0xa0] sm:$0xf0] %v819
        %824 = vst [vmem:[#allocation3 + $0xa8] sm:$0xf0] %v820
        %v825 = vld [vmem:[#allocation2 + $0x4] sm:$0xff]
        %v826 = vld [vmem:[#allocation2 + $0xc] sm:$0xf]
        %v829 = vcombine.high %v825, %v825
        %830 = vrot.lane.b32.xlu0 %v825, 92
        %v831 = vpop.permute.xlu0 %830
        %832 = vrot.lane.b32.xlu0 %v829, 92
        %v833 = vpop.permute.xlu0 %832
        %834 = vrot.lane.b32.xlu0 %v826, 92
        %v835 = vpop.permute.xlu0 %834
        %vm836 = vcmask 752640
        %v837 = vsel %vm836, %v831, %v833
        %v838 = vsel %vm836, %v833, %v835
        %841 = vst [vmem:[#allocation3 + $0xb0] sm:$0xf] %v837
        %842 = vst [vmem:[#allocation3 + $0xb8] sm:$0xf] %v838
        %v843 = vld [vmem:[#allocation2 + $0x4] sm:$0xff]
        %v844 = vld [vmem:[#allocation2 + $0xc] sm:$0xf]
        %v847 = vcombine.low %v843, %v843
        %v848 = vcombine.low %v844, %v844
        %849 = vrot.lane.b32.xlu0 %v847, 91
        %v850 = vpop.permute.xlu0 %849
        %851 = vrot.lane.b32.xlu0 %v843, 91
        %v852 = vpop.permute.xlu0 %851
        %853 = vrot.lane.b32.xlu0 %v848, 91
        %v854 = vpop.permute.xlu0 %853
        %vm855 = vcmask 744448
        %v856 = vsel %vm855, %v850, %v852
        %v857 = vsel %vm855, %v852, %v854
        %860 = vst [vmem:[#allocation3 + $0xb0] sm:$0xf0] %v856
        %861 = vst [vmem:[#allocation3 + $0xb8] sm:$0xf0] %v857
        %v862 = vld [vmem:[#allocation2 + $0x4] sm:$0xff]
        %v863 = vld [vmem:[#allocation2 + $0xc] sm:$0xf]
        %v866 = vcombine.high %v862, %v862
        %867 = vrot.lane.b32.xlu0 %v862, 87
        %v868 = vpop.permute.xlu0 %867
        %869 = vrot.lane.b32.xlu0 %v866, 87
        %v870 = vpop.permute.xlu0 %869
        %871 = vrot.lane.b32.xlu0 %v863, 87
        %v872 = vpop.permute.xlu0 %871
        %vm873 = vcmask 711680
        %v874 = vsel %vm873, %v868, %v870
        %v875 = vsel %vm873, %v870, %v872
        %878 = vst [vmem:[#allocation3 + $0xc0] sm:$0xf] %v874
        %879 = vst [vmem:[#allocation3 + $0xc8] sm:$0xf] %v875
        %v880 = vld [vmem:[#allocation2 + $0x4] sm:$0xff]
        %v881 = vld [vmem:[#allocation2 + $0xc] sm:$0xf]
        %v884 = vcombine.low %v880, %v880
        %v885 = vcombine.low %v881, %v881
        %886 = vrot.lane.b32.xlu0 %v884, 86
        %v887 = vpop.permute.xlu0 %886
        %888 = vrot.lane.b32.xlu0 %v880, 86
        %v889 = vpop.permute.xlu0 %888
        %890 = vrot.lane.b32.xlu0 %v885, 86
        %v891 = vpop.permute.xlu0 %890
        %vm892 = vcmask 703488
        %v893 = vsel %vm892, %v887, %v889
        %v894 = vsel %vm892, %v889, %v891
        %897 = vst [vmem:[#allocation3 + $0xc0] sm:$0xf0] %v893
        %898 = vst [vmem:[#allocation3 + $0xc8] sm:$0xf0] %v894
        %v899 = vld [vmem:[#allocation2 + $0x4] sm:$0xff]
        %v900 = vld [vmem:[#allocation2 + $0xc] sm:$0xf]
        %v903 = vcombine.high %v899, %v899
        %904 = vrot.lane.b32.xlu0 %v899, 85
        %v905 = vpop.permute.xlu0 %904
        %906 = vrot.lane.b32.xlu0 %v903, 85
        %v907 = vpop.permute.xlu0 %906
        %908 = vrot.lane.b32.xlu0 %v900, 85
        %v909 = vpop.permute.xlu0 %908
        %vm910 = vcmask 695296
        %v911 = vsel %vm910, %v905, %v907
        %v912 = vsel %vm910, %v907, %v909
        %915 = vst [vmem:[#allocation3 + $0xd0] sm:$0xf] %v911
        %916 = vst [vmem:[#allocation3 + $0xd8] sm:$0xf] %v912
        %917 = vst [vmem:[#allocation3 + $0xd0] sm:$0xf0] 0.0
        %918 = vst [vmem:[#allocation3 + $0xd8] sm:$0xf0] 0.0
        %919 = vst [vmem:[#allocation3 + $0xe0] sm:$0xff] 0.0
        %920 = vst [vmem:[#allocation3 + $0xe8] sm:$0xff] 0.0
        %921 = vst [vmem:[#allocation3 + $0xf0] sm:$0xff] 0.0
        %922 = vst [vmem:[#allocation3 + $0xf8] sm:$0xff] 0.0
        %v923 = vld [vmem:[#allocation4] sm:$0xff]
        %v924 = vld [vmem:[#allocation3] sm:$0xff]
        %v925 = vld [vmem:[#allocation3 + $0x8] sm:$0xff]
        %v926 = vld [vmem:[#allocation3 + $0x10] sm:$0xff]
        %v927 = vld [vmem:[#allocation3 + $0x18] sm:$0xff]
        %v928 = vld [vmem:[#allocation3 + $0x20] sm:$0xff]
        %v929 = vld [vmem:[#allocation3 + $0x28] sm:$0xff]
        %v930 = vld [vmem:[#allocation3 + $0x30] sm:$0xff]
        %v931 = vld [vmem:[#allocation3 + $0x38] sm:$0xff]
        %v932 = vld [vmem:[#allocation3 + $0x40] sm:$0xff]
        %v933 = vld [vmem:[#allocation3 + $0x48] sm:$0xff]
        %v934 = vld [vmem:[#allocation3 + $0x50] sm:$0xff]
        %v935 = vld [vmem:[#allocation3 + $0x58] sm:$0xff]
        %v936 = vld [vmem:[#allocation3 + $0x60] sm:$0xff]
        %v937 = vld [vmem:[#allocation3 + $0x68] sm:$0xff]
        %v938 = vld [vmem:[#allocation3 + $0x70] sm:$0xff]
        %v939 = vld [vmem:[#allocation3 + $0x78] sm:$0xff]
        %v940 = vld [vmem:[#allocation3 + $0x80] sm:$0xff]
        %v941 = vld [vmem:[#allocation3 + $0x88] sm:$0xff]
        %v942 = vld [vmem:[#allocation3 + $0x90] sm:$0xff]
        %v943 = vld [vmem:[#allocation3 + $0x98] sm:$0xff]
        %v944 = vld [vmem:[#allocation3 + $0xa0] sm:$0xff]
        %v945 = vld [vmem:[#allocation3 + $0xa8] sm:$0xff]
        %v946 = vld [vmem:[#allocation3 + $0xb0] sm:$0xff]
        %v947 = vld [vmem:[#allocation3 + $0xb8] sm:$0xff]
        %v948 = vld [vmem:[#allocation3 + $0xc0] sm:$0xff]
        %v949 = vld [vmem:[#allocation3 + $0xc8] sm:$0xff]
        %v950 = vld [vmem:[#allocation3 + $0xd0] sm:$0xff]
        %v951 = vld [vmem:[#allocation3 + $0xd8] sm:$0xff]
        %v952 = vld [vmem:[#allocation3 + $0xe0] sm:$0xff]
        %v953 = vld [vmem:[#allocation3 + $0xe8] sm:$0xff]
        %v954 = vld [vmem:[#allocation3 + $0xf0] sm:$0xff]
        %v955 = vld [vmem:[#allocation3 + $0xf8] sm:$0xff]
        %956 = vmatprep.subr.mxu0 %v925
        %957 = vmatpush1.msra.mxu0 %v924
        %958 = vmatprep.subr.mxu0 %v927
        %959 = vmatpush1.msra.mxu0 %v926
        %960 = vmatprep.subr.mxu0 %v929
        %961 = vmatpush1.msra.mxu0 %v928
        %962 = vmatprep.subr.mxu0 %v931
        %963 = vmatpush1.msra.mxu0 %v930
        %964 = vmatprep.subr.mxu0 %v933
        %965 = vmatpush1.msra.mxu0 %v932
        %966 = vmatprep.subr.mxu0 %v935
        %967 = vmatpush1.msra.mxu0 %v934
        %968 = vmatprep.subr.mxu0 %v937
        %969 = vmatpush1.msra.mxu0 %v936
        %970 = vmatprep.subr.mxu0 %v939
        %971 = vmatpush1.msra.mxu0 %v938
        %972 = vmatprep.subr.mxu0 %v941
        %973 = vmatpush1.msra.mxu0 %v940
        %974 = vmatprep.subr.mxu0 %v943
        %975 = vmatpush1.msra.mxu0 %v942
        %976 = vmatprep.subr.mxu0 %v945
        %977 = vmatpush1.msra.mxu0 %v944
        %978 = vmatprep.subr.mxu0 %v947
        %979 = vmatpush1.msra.mxu0 %v946
        %980 = vmatprep.subr.mxu0 %v949
        %981 = vmatpush1.msra.mxu0 %v948
        %982 = vmatprep.subr.mxu0 %v951
        %983 = vmatpush1.msra.mxu0 %v950
        %984 = vmatprep.subr.mxu0 %v953
        %985 = vmatpush1.msra.mxu0 %v952
        %986 = vmatprep.subr.mxu0 %v955
        %987 = vmatpush1.msra.mxu0 %v954
        %988 = vmatprep.subr.mxu0 0.0
        %989 = vmatpush1.msra.mxu0 0.0
        %990 = vmatprep.subr.mxu0 0.0
        %991 = vmatpush1.msra.mxu0 0.0
        %992 = vmatprep.subr.mxu0 0.0
        %993 = vmatpush1.msra.mxu0 0.0
        %994 = vmatprep.subr.mxu0 0.0
        %995 = vmatpush1.msra.mxu0 0.0
        %996 = vmatprep.subr.mxu0 0.0
        %997 = vmatpush1.msra.mxu0 0.0
        %998 = vmatprep.subr.mxu0 0.0
        %999 = vmatpush1.msra.mxu0 0.0
        %1000 = vmatprep.subr.mxu0 0.0
        %1001 = vmatpush1.msra.mxu0 0.0
        %1002 = vmatprep.subr.mxu0 0.0
        %1003 = vmatpush1.msra.mxu0 0.0
        %1004 = vmatprep.subr.mxu0 0.0
        %1005 = vmatpush1.msra.mxu0 0.0
        %1006 = vmatprep.subr.mxu0 0.0
        %1007 = vmatpush1.msra.mxu0 0.0
        %1008 = vmatprep.subr.mxu0 0.0
        %1009 = vmatpush1.msra.mxu0 0.0
        %1010 = vmatprep.subr.mxu0 0.0
        %1011 = vmatpush1.msra.mxu0 0.0
        %1012 = vmatprep.subr.mxu0 0.0
        %1013 = vmatpush1.msra.mxu0 0.0
        %1014 = vmatprep.subr.mxu0 0.0
        %1015 = vmatpush1.msra.mxu0 0.0
        %1016 = vmatprep.subr.mxu0 0.0
        %1017 = vmatpush1.msra.mxu0 0.0
        %1018 = vmatprep.subr.mxu0 0.0
        %1019 = vmatpush1.msra.mxu0 0.0
        %1020 = vmatprep.mubr.f32.mxu0 0.0
        %1021 = vmatmul.mubr.f32.gmra.mrb[0].mxu0 %v923
        %v1022 = vpop.f32.mrb[0].mxu0
        %v1023 = vadd.f32 0.0, %v1022
        %v1024 = vpop.f32.mrb[0].mxu0
        %v1025 = vadd.f32 0.0, %v1024
        %1026 = vdwg.mxu0
        %v1027 = vld [vmem:[%s409] sm:$0x3]
        %v1029 = vlaneseq
        %v1030 = vshrl.u32 %v1029, 7
        %v1031 = vsub.s32 0, %v1030
        %v1032 = vrot.slane %v1027, %v1031
        %v1033 = vlaneseq
        %v1034 = vshrl.u32 %v1033, 7
        %v1035 = vsub.s32 1, %v1034
        %v1036 = vrot.slane %v1027, %v1035
        %v1039 = vmul.f32 %v1023, %v1032
        %v1040 = vmul.f32 %v1025, %v1036
        %1041 = vst [vmem:[%s415] sm:$0xff] %v1039
        %1042 = vst [vmem:[%s415 + $0x8] sm:$0xff] %v1040
        %v1043 = vadd.f32 %v1039, %v1040
        %1044 = vadd.xlane.f32.xlu0 %v1043
        %v1045 = vpop.xlane.xlu0 %1044
        %1046 = vst.msk [vmem:[%s420] sm:$0xff] %vm664, %v1045
        %v1047 = vmul.f32 %v1039, %v1039
        %v1048 = vmul.f32 %v1040, %v1040
        %v1049 = vadd.f32 %v1047, %v1048
        %1050 = vadd.xlane.f32.xlu0 %v1049
        %v1051 = vpop.xlane.xlu0 %1050
        %1052 = vst.msk [vmem:[%s424] sm:$0xff] %vm664, %v1051
        %s1053 = smul.u32 2, %s20
        %p1054 = scmp.lt.s32.totalorder %s1053, 3
        %s1055 = scalar_select %p1054, %s1053, 3
        %s1056 = smul.addr %s1055, 8
        %s1057 = scalar_lea.vmem %s5, %s1056
        %p1058 = scmp.lt.s32.totalorder %s20, 1
        %s1059 = scalar_select %p1058, %s20, 1
        %s1060 = smul.addr %s1059, 8
        %s1061 = scalar_lea.vmem %s6, %s1060
        %p1062 = scmp.lt.s32.totalorder %s20, 1
        %s1063 = scalar_select %p1062, %s20, 1
        %s1064 = smul.addr %s1063, 8
        %s1065 = scalar_lea.vmem %s7, %s1064
        // Predicated region
        $region45: #{node_decoder_forward.3} parent=39 // pred_check
          %p1066 = pneg %p179
        $region46: #{node_decoder_forward.3} parent=39 // pred_check_branch
          %1068 = sbr.rel (%p1066) target = $region48
        $region47: #{node_decoder_forward.3} parent=39 // pred_region
          %s1069 = smul.u32 2, %s20
        $region48: #{node_decoder_forward.3} parent=39 // pred_fallthru
          _
        // Predicated region
        $region49: #{node_decoder_forward.3} parent=39 // pred_check
          %p1070 = pneg %p205
        $region50: #{node_decoder_forward.3} parent=39 // pred_check_branch
          %1072 = sbr.rel (%p1070) target = $region52
        $region51: #{node_decoder_forward.3} parent=39 // pred_region
          _
        $region52: #{node_decoder_forward.3} parent=39 // pred_fallthru
          _
        // Predicated region
        $region53: #{node_decoder_forward.3} parent=39 // pred_check
          %p1073 = pneg %p231
        $region54: #{node_decoder_forward.3} parent=39 // pred_check_branch
          %1075 = sbr.rel (%p1073) target = $region56
        $region55: #{node_decoder_forward.3} parent=39 // pred_region
          _
        $region56: #{node_decoder_forward.3} parent=39 // pred_fallthru
          _
      $region40: #{node_decoder_forward.3} parent=5 // pred_fallthru
        _
      %p1076 = scmp.le.s32.totalorder 2, %s15
      // Predicated region
      $region57: #{node_decoder_forward.3} parent=5 // pred_check
        %p1077 = pneg %p1076
      $region58: #{node_decoder_forward.3} parent=5 // pred_check_branch
        %1079 = sbr.rel (%p1077) target = $region60
      $region59: #{node_decoder_forward.3} parent=5 // pred_region
        %s1080 = ssub.s32 %s15, 2
        // Predicated region
        $region61: #{node_decoder_forward.3} parent=59 // pred_check
          %p1081 = pneg %p185
        $region62: #{node_decoder_forward.3} parent=59 // pred_check_branch
          %1083 = sbr.rel (%p1081) target = $region64
        $region63: #{node_decoder_forward.3} parent=59 // pred_region
          %s1084 = smul.u32 2, %s21
          %p1085 = scmp.lt.s32.totalorder %s1084, 3
          %s1086 = scalar_select %p1085, %s1084, 3
          %s1087 = smul.addr %s1086, 8
          %s1088 = scalar_lea.vmem %s5, %s1087
        $region64: #{node_decoder_forward.3} parent=59 // pred_fallthru
          _
        // Predicated region
        $region65: #{node_decoder_forward.3} parent=59 // pred_check
          %p1089 = pneg %p211
        $region66: #{node_decoder_forward.3} parent=59 // pred_check_branch
          %1091 = sbr.rel (%p1089) target = $region68
        $region67: #{node_decoder_forward.3} parent=59 // pred_region
          %p1092 = scmp.lt.s32.totalorder %s21, 1
          %s1093 = scalar_select %p1092, %s21, 1
          %s1094 = smul.addr %s1093, 8
          %s1095 = scalar_lea.vmem %s6, %s1094
        $region68: #{node_decoder_forward.3} parent=59 // pred_fallthru
          _
        // Predicated region
        $region69: #{node_decoder_forward.3} parent=59 // pred_check
          %p1096 = pneg %p237
        $region70: #{node_decoder_forward.3} parent=59 // pred_check_branch
          %1098 = sbr.rel (%p1096) target = $region72
        $region71: #{node_decoder_forward.3} parent=59 // pred_region
          %p1099 = scmp.lt.s32.totalorder %s21, 1
          %s1100 = scalar_select %p1099, %s21, 1
          %s1101 = smul.addr %s1100, 8
          %s1102 = scalar_lea.vmem %s7, %s1101
        $region72: #{node_decoder_forward.3} parent=59 // pred_fallthru
          _
      $region60: #{node_decoder_forward.3} parent=5 // pred_fallthru
        _
    $region6: #{node_decoder_forward.3} parent=1 // loop_footer
      %s19 = sadd.s32 1, %s15
    $region7: #{node_decoder_forward.3} parent=1 // loop_footer_branch
      %14 = sbr.rel target = $region3
    $region8: #{node_decoder_forward.3} parent=1 // loop_exit
      _
    %1103 = vsyncpa [#allocation5], 1
    %s1104 = scalar_lea.sflag [#allocation5], 1
    %1105 = vsyncpa %s1104, 1

</llo_original>
